<compile_context>
chip_gen: v5e
topology: v5e:2x2
jax: 0.10.0
libtpu: 0.0.40
codegen_flags: <defaults>
</compile_context>

<pallas_src>
import functools

import jax
import jax.numpy as jnp
from jax.experimental import pallas as pl
from jax.experimental.pallas import tpu as pltpu

_LANE = 128     # lane width
_SUBLANE = 8    # f32 sublane packing


def _round_up(n, m):
    return ((n + m - 1) // m) * m


def _feature_pack(p):
    """Padded feature width P_pad (divides 128, or multiple of 128 for wide
    inputs) and R = batch elements per 128-lane row group."""
    if p >= _LANE:
        return _round_up(p, _LANE), 1
    p_pad = 1
    while p_pad < p:
        p_pad *= 2
    return p_pad, _LANE // p_pad


def _mlp_rows_kernel(x_ref,
                     w1_ref, b1_ref, w2_ref, b2_ref,
                     w3_ref, b3_ref, w4_ref, b4_ref,
                     o_ref, *, row_chunk):
    """One grid step: `rows` interleaved batch rows through the 4-layer MLP.

    x_ref : (rows, R*P_pad) -- each 128-lane row holds R whole batch elements.
    w*_ref: block-diagonal kron(I_R, W_l.T);  b*_ref: (1, R*out_l) tiled bias.
    o_ref : (rows, R*F).
    Rows are processed in chunks so each chunk's hidden activations stay in
    the vector register file / a small VMEM working set.
    """
    rows = x_ref.shape[0]
    n_chunks = rows // row_chunk

    def body(c, carry):
        r0 = pl.multiple_of(c * row_chunk, _SUBLANE)
        x = x_ref[pl.ds(r0, row_chunk), :]
        h = jnp.dot(x, w1_ref[...], preferred_element_type=jnp.float32) + b1_ref[...]
        h = jnp.maximum(h, 0.0)
        h = jnp.dot(h, w2_ref[...], preferred_element_type=jnp.float32) + b2_ref[...]
        h = jnp.maximum(h, 0.0)
        h = jnp.dot(h, w3_ref[...], preferred_element_type=jnp.float32) + b3_ref[...]
        h = jnp.maximum(h, 0.0)
        y = jnp.dot(h, w4_ref[...], preferred_element_type=jnp.float32) + b4_ref[...]
        o_ref[pl.ds(r0, row_chunk), :] = y.astype(o_ref.dtype)
        return carry

    jax.lax.fori_loop(0, n_chunks, body, None, unroll=n_chunks <= 4)


def _pack_layer(w, b, r, in_pad):
    """Expand one nn.Linear layer (w: (out,in), b: (out,)) into its
    block-diagonal form for the lane-interleaved batch layout."""
    out_dim, in_dim = w.shape
    wt = w.T.astype(jnp.float32)
    if in_pad != in_dim:
        wt = jnp.concatenate(
            [wt, jnp.zeros((in_pad - in_dim, out_dim), jnp.float32)], axis=0)
    w_big = jnp.kron(jnp.eye(r, dtype=jnp.float32), wt)              # (r*in_pad, r*out)
    b_big = jnp.tile(b.reshape(-1).astype(jnp.float32), r).reshape(1, -1)
    return w_big, b_big


def _vmem_bytes(rows, cols, itemsize=4):
    return _round_up(max(rows, 1), _SUBLANE) * _round_up(max(cols, 1), _LANE) * itemsize


def network_features_forward(x, params, *, tb=131072, row_chunk=256):
    """Forward pass of Network_Features.

    x:       (B, num_params) float32
    params:  dict of w1..w4 with shape (out, in) [PyTorch nn.Linear layout]
             and b1..b4 with shape (out,)
    tb:      batch elements per grid step.  Default 131072 amortizes the
             ~0.35 us per-step pipeline overhead against ~4.7 MB of HBM per
             step, with a ~20 MiB VMEM footprint that fits v5e/v6e/v7x.
             Sweep 32K-256K per generation for the last few percent.
    row_chunk: rows of the interleaved layout per inner iteration; trades MXU
             weight-push amortization (larger) vs vreg residency (smaller).
    returns: (B, num_features) float32
    """
    B, P = x.shape
    F = params["w4"].shape[0]

    p_pad, r = _feature_pack(P)
    granule = r * _SUBLANE           # batch elements per 8-sublane row group

    # --- tile selection ------------------------------------------------------
    need = _round_up(B, granule)
    tb = max(granule, _round_up(min(int(tb), need), granule))
    # v7x has two TensorCores: if the whole (large) batch fits in one tile,
    # split it so the "parallel" grid axis has >= 2 steps to shard.
    if tb == need and need >= max(2 * granule, 8192):
        tb = _round_up((need + 1) // 2, granule)
    B_pad = _round_up(need, tb)
    num_tiles = B_pad // tb
    rows_per_tile = tb // r

    chunk = max(_SUBLANE, _round_up(min(int(row_chunk), rows_per_tile), _SUBLANE))
    while rows_per_tile % chunk != 0:
        chunk -= _SUBLANE

    # --- lane-dense interleaved input: a free reshape, no transpose pass -----
    x_p = x.astype(jnp.float32)
    if p_pad != P:
        x_p = jnp.pad(x_p, ((0, 0), (0, p_pad - P)))
    if B_pad != B:
        x_p = jnp.pad(x_p, ((0, B_pad - B), (0, 0)))
    x_rows = x_p.reshape(B_pad // r, r * p_pad)

    # --- block-diagonal weights: tiny, VMEM-resident across the whole grid ---
    w1, b1 = _pack_layer(params["w1"], params["b1"], r, p_pad)
    w2, b2 = _pack_layer(params["w2"], params["b2"], r, params["w2"].shape[1])
    w3, b3 = _pack_layer(params["w3"], params["b3"], r, params["w3"].shape[1])
    w4, b4 = _pack_layer(params["w4"], params["b4"], r, params["w4"].shape[1])
    weight_args = (w1, b1, w2, b2, w3, b3, w4, b4)

    in_specs = [pl.BlockSpec((rows_per_tile, r * p_pad), lambda i: (i, 0))]
    for a in weight_args:
        # Full-array block, constant index -> DMA'd once, stays VMEM-resident.
        in_specs.append(pl.BlockSpec(a.shape, lambda i: (0, 0)))
    out_spec = pl.BlockSpec((rows_per_tile, r * F), lambda i: (i, 0))

    # --- VMEM budget (blocks are double-buffered); leave headroom ------------
    weight_vmem = sum(_vmem_bytes(*a.shape) for a in weight_args)
    io_vmem = 2 * (_vmem_bytes(rows_per_tile, r * p_pad)
                   + _vmem_bytes(rows_per_tile, r * F))
    act_vmem = 2 * chunk * sum(_round_up(r * d, _LANE) for d in (6, 8, 10, F)) * 4
    vmem_need = io_vmem + 2 * weight_vmem + act_vmem + (4 << 20)
    vmem_limit = int(min(max(vmem_need * 5 // 4, 32 << 20), 96 << 20))

    # --- advisory cost estimate: padded sizes the kernel actually touches ----
    k_dims = (r * p_pad, r * 6, r * 8, r * 10)
    n_dims = (r * 6, r * 8, r * 10, r * F)
    flops = 2 * (B_pad // r) * sum(k * n for k, n in zip(k_dims, n_dims))
    bytes_accessed = (int(x_rows.size) + (B_pad // r) * (r * F)) * 4 \
        + sum(int(a.size) * 4 for a in weight_args)
    cost = pl.CostEstimate(flops=int(flops), transcendentals=0,
                           bytes_accessed=int(bytes_accessed))

    out_rows = pl.pallas_call(
        functools.partial(_mlp_rows_kernel, row_chunk=chunk),
        out_shape=jax.ShapeDtypeStruct((B_pad // r, r * F), jnp.float32),
        grid=(num_tiles,),
        in_specs=in_specs,
        out_specs=out_spec,
        compiler_params=pltpu.CompilerParams(
            dimension_semantics=("parallel",),   # megacore split on v7x
            vmem_limit_bytes=vmem_limit),
        cost_estimate=cost,
    )(x_rows, *weight_args)

    out = out_rows.reshape(B_pad, F)          # free reshape back to (B_pad, F)
    if B_pad != B:
        out = out[:B]                         # drop zero-padded batch rows
    return out


def init_params(key, num_params, num_features):
    """nn.Linear-style init: uniform +-1/sqrt(fan_in); weights in (out, in)."""
    dims = [(num_params, 6), (6, 8), (8, 10), (10, num_features)]
    params = {}
    for i, (fan_in, fan_out) in enumerate(dims, start=1):
        key, kw, kb = jax.random.split(key, 3)
        bound = float(1.0 / (fan_in ** 0.5))
        params[f"w{i}"] = jax.random.uniform(kw, (fan_out, fan_in), jnp.float32,
                                             -bound, bound)
        params[f"b{i}"] = jax.random.uniform(kb, (fan_out,), jnp.float32,
                                             -bound, bound)
    return params


def reference_forward(x, params):
    hp = jax.lax.Precision.HIGHEST
    h = jnp.maximum(jnp.dot(x, params["w1"].T, precision=hp) + params["b1"], 0.0)
    h = jnp.maximum(jnp.dot(h, params["w2"].T, precision=hp) + params["b2"], 0.0)
    h = jnp.maximum(jnp.dot(h, params["w3"].T, precision=hp) + params["b3"], 0.0)
    return jnp.dot(h, params["w4"].T, precision=hp) + params["b4"]


if __name__ == "__main__":
    num_params = 4
    num_features = 5

    key = jax.random.PRNGKey(0)
    params = init_params(key, num_params, num_features)

    fwd = jax.jit(network_features_forward, static_argnames=("tb", "row_chunk"))

    # 1) Small batch: single tile, batch padded up to one 256-element granule.
    key, kx = jax.random.split(key)
    x1 = jax.random.normal(kx, (8, num_params), dtype=jnp.float32)
    out1 = jax.block_until_ready(fwd(x1, params))
    ref1 = reference_forward(x1, params)
    assert out1.shape == (8, num_features)
    assert jnp.allclose(out1, ref1, atol=1e-4, rtol=1e-4), "mismatch (B=8)"

    # 2) Ragged batch + small explicit tile: multi-tile grid and pad/slice path.
    key, kx = jax.random.split(key)
    x2 = jax.random.normal(kx, (300, num_params), dtype=jnp.float32)
    out2 = jax.block_until_ready(fwd(x2, params, tb=256))
    ref2 = reference_forward(x2, params)
    assert out2.shape == (300, num_features)
    assert jnp.allclose(out2, ref2, atol=1e-4, rtol=1e-4), "mismatch (B=300)"

    # 3) Larger batch, default tb: exercises the >=2-tile split (v7x megacore
    #    path) and a multi-iteration in-kernel row-chunk loop.
    key, kx = jax.random.split(key)
    x3 = jax.random.normal(kx, (12000, num_params), dtype=jnp.float32)
    out3 = jax.block_until_ready(fwd(x3, params, row_chunk=64))
    ref3 = reference_forward(x3, params)
    assert out3.shape == (12000, num_features)
    assert jnp.allclose(out3, ref3, atol=1e-4, rtol=1e-4), "mismatch (B=12000)"

    print("KERNEL_OK")
</pallas_src>

<mosaic_0001>
module attributes {stable_mosaic.version = 11 : i64} {
  func.func @_mlp_rows_kernel(%arg0: i32, %arg1: memref<8x128xf32, #tpu.memory_space<vmem>>, %arg2: memref<128x192xf32, #tpu.memory_space<vmem>>, %arg3: memref<1x192xf32, #tpu.memory_space<vmem>>, %arg4: memref<192x256xf32, #tpu.memory_space<vmem>>, %arg5: memref<1x256xf32, #tpu.memory_space<vmem>>, %arg6: memref<256x320xf32, #tpu.memory_space<vmem>>, %arg7: memref<1x320xf32, #tpu.memory_space<vmem>>, %arg8: memref<320x160xf32, #tpu.memory_space<vmem>>, %arg9: memref<1x160xf32, #tpu.memory_space<vmem>>, %arg10: memref<8x160xf32, #tpu.memory_space<vmem>>) attributes {dimension_semantics = [#tpu.dimension_semantics<parallel>], iteration_bounds = array<i64: 1>, scalar_prefetch = 0 : i64, scratch_operands = 0 : i64, tpu.core_type = #tpu.core_type<tc>, window_params = [{transform_indices = @transform_0, window_bounds = array<i64: 8, 128>}, {pipeline_mode = #tpu.pipeline_mode<synchronous>, transform_indices = @transform_1, window_bounds = array<i64: 128, 192>}, {pipeline_mode = #tpu.pipeline_mode<synchronous>, transform_indices = @transform_2, window_bounds = array<i64: 1, 192>}, {pipeline_mode = #tpu.pipeline_mode<synchronous>, transform_indices = @transform_3, window_bounds = array<i64: 192, 256>}, {pipeline_mode = #tpu.pipeline_mode<synchronous>, transform_indices = @transform_4, window_bounds = array<i64: 1, 256>}, {pipeline_mode = #tpu.pipeline_mode<synchronous>, transform_indices = @transform_5, window_bounds = array<i64: 256, 320>}, {pipeline_mode = #tpu.pipeline_mode<synchronous>, transform_indices = @transform_6, window_bounds = array<i64: 1, 320>}, {pipeline_mode = #tpu.pipeline_mode<synchronous>, transform_indices = @transform_7, window_bounds = array<i64: 320, 160>}, {pipeline_mode = #tpu.pipeline_mode<synchronous>, transform_indices = @transform_8, window_bounds = array<i64: 1, 160>}, {transform_indices = @transform_9, window_bounds = array<i64: 8, 160>}]} {
    %c0_i32 = arith.constant 0 : i32
    %c8_i32 = arith.constant 8 : i32
    %0 = arith.muli %c0_i32, %c8_i32 : i32
    %1 = tpu.assume_multiple %0, 8 : i32
    %2 = arith.index_cast %1 : i32 to index
    %c0 = arith.constant 0 : index
    %3 = vector.load %arg1[%2, %c0] : memref<8x128xf32, #tpu.memory_space<vmem>>, vector<8x128xf32>
    %c0_0 = arith.constant 0 : index
    %c0_1 = arith.constant 0 : index
    %4 = vector.load %arg2[%c0_0, %c0_1] : memref<128x192xf32, #tpu.memory_space<vmem>>, vector<128x192xf32>
    %cst = arith.constant dense<0.000000e+00> : vector<8x192xf32>
    %5 = tpu.matmul %3, %4, %cst {dimension_numbers = #tpu.dot_dimension_numbers<[1], [0], [0], [1], [0, 0, 1, 1], [], []>} : vector<8x128xf32>, vector<128x192xf32>, vector<8x192xf32> -> vector<8x192xf32>
    %c0_2 = arith.constant 0 : index
    %c0_3 = arith.constant 0 : index
    %6 = vector.load %arg3[%c0_2, %c0_3] : memref<1x192xf32, #tpu.memory_space<vmem>>, vector<1x192xf32>
    %7 = vector.broadcast %6 : vector<1x192xf32> to vector<8x192xf32>
    %8 = arith.addf %5, %7 : vector<8x192xf32>
    %cst_4 = arith.constant 0.000000e+00 : f32
    %9 = vector.broadcast %cst_4 : f32 to vector<8x192xf32>
    %10 = arith.maximumf %8, %9 : vector<8x192xf32>
    %c0_5 = arith.constant 0 : index
    %c0_6 = arith.constant 0 : index
    %11 = vector.load %arg4[%c0_5, %c0_6] : memref<192x256xf32, #tpu.memory_space<vmem>>, vector<192x256xf32>
    %cst_7 = arith.constant dense<0.000000e+00> : vector<8x256xf32>
    %12 = tpu.matmul %10, %11, %cst_7 {dimension_numbers = #tpu.dot_dimension_numbers<[1], [0], [0], [1], [0, 0, 1, 1], [], []>} : vector<8x192xf32>, vector<192x256xf32>, vector<8x256xf32> -> vector<8x256xf32>
    %c0_8 = arith.constant 0 : index
    %c0_9 = arith.constant 0 : index
    %13 = vector.load %arg5[%c0_8, %c0_9] : memref<1x256xf32, #tpu.memory_space<vmem>>, vector<1x256xf32>
    %14 = vector.broadcast %13 : vector<1x256xf32> to vector<8x256xf32>
    %15 = arith.addf %12, %14 : vector<8x256xf32>
    %cst_10 = arith.constant 0.000000e+00 : f32
    %16 = vector.broadcast %cst_10 : f32 to vector<8x256xf32>
    %17 = arith.maximumf %15, %16 : vector<8x256xf32>
    %c0_11 = arith.constant 0 : index
    %c0_12 = arith.constant 0 : index
    %18 = vector.load %arg6[%c0_11, %c0_12] : memref<256x320xf32, #tpu.memory_space<vmem>>, vector<256x320xf32>
    %cst_13 = arith.constant dense<0.000000e+00> : vector<8x320xf32>
    %19 = tpu.matmul %17, %18, %cst_13 {dimension_numbers = #tpu.dot_dimension_numbers<[1], [0], [0], [1], [0, 0, 1, 1], [], []>} : vector<8x256xf32>, vector<256x320xf32>, vector<8x320xf32> -> vector<8x320xf32>
    %c0_14 = arith.constant 0 : index
    %c0_15 = arith.constant 0 : index
    %20 = vector.load %arg7[%c0_14, %c0_15] : memref<1x320xf32, #tpu.memory_space<vmem>>, vector<1x320xf32>
    %21 = vector.broadcast %20 : vector<1x320xf32> to vector<8x320xf32>
    %22 = arith.addf %19, %21 : vector<8x320xf32>
    %cst_16 = arith.constant 0.000000e+00 : f32
    %23 = vector.broadcast %cst_16 : f32 to vector<8x320xf32>
    %24 = arith.maximumf %22, %23 : vector<8x320xf32>
    %c0_17 = arith.constant 0 : index
    %c0_18 = arith.constant 0 : index
    %25 = vector.load %arg8[%c0_17, %c0_18] : memref<320x160xf32, #tpu.memory_space<vmem>>, vector<320x160xf32>
    %cst_19 = arith.constant dense<0.000000e+00> : vector<8x160xf32>
    %26 = tpu.matmul %24, %25, %cst_19 {dimension_numbers = #tpu.dot_dimension_numbers<[1], [0], [0], [1], [0, 0, 1, 1], [], []>} : vector<8x320xf32>, vector<320x160xf32>, vector<8x160xf32> -> vector<8x160xf32>
    %c0_20 = arith.constant 0 : index
    %c0_21 = arith.constant 0 : index
    %27 = vector.load %arg9[%c0_20, %c0_21] : memref<1x160xf32, #tpu.memory_space<vmem>>, vector<1x160xf32>
    %28 = vector.broadcast %27 : vector<1x160xf32> to vector<8x160xf32>
    %29 = arith.addf %26, %28 : vector<8x160xf32>
    %30 = arith.index_cast %1 : i32 to index
    %c0_22 = arith.constant 0 : index
    %31 = vector.load %arg10[%30, %c0_22] : memref<8x160xf32, #tpu.memory_space<vmem>>, vector<8x160xf32>
    tpu.vector_store %arg10[%30, %c0_22], %29 {strides = array<i32>} : memref<8x160xf32, #tpu.memory_space<vmem>>, vector<8x160xf32>,
    %c1_i32 = arith.constant 1 : i32
    return
  }
  func.func @transform_0(%arg0: i32) -> (i32, i32) {
    %c0_i32 = arith.constant 0 : i32
    %c0_i32_0 = arith.constant 0 : i32
    return %arg0, %c0_i32 : i32, i32
  }
  func.func @transform_1(%arg0: i32) -> (i32, i32) {
    %c0_i32 = arith.constant 0 : i32
    %c0_i32_0 = arith.constant 0 : i32
    %c0_i32_1 = arith.constant 0 : i32
    return %c0_i32, %c0_i32_0 : i32, i32
  }
  func.func @transform_2(%arg0: i32) -> (i32, i32) {
    %c0_i32 = arith.constant 0 : i32
    %c0_i32_0 = arith.constant 0 : i32
    %c0_i32_1 = arith.constant 0 : i32
    return %c0_i32, %c0_i32_0 : i32, i32
  }
  func.func @transform_3(%arg0: i32) -> (i32, i32) {
    %c0_i32 = arith.constant 0 : i32
    %c0_i32_0 = arith.constant 0 : i32
    %c0_i32_1 = arith.constant 0 : i32
    return %c0_i32, %c0_i32_0 : i32, i32
  }
  func.func @transform_4(%arg0: i32) -> (i32, i32) {
    %c0_i32 = arith.constant 0 : i32
    %c0_i32_0 = arith.constant 0 : i32
    %c0_i32_1 = arith.constant 0 : i32
    return %c0_i32, %c0_i32_0 : i32, i32
  }
  func.func @transform_5(%arg0: i32) -> (i32, i32) {
    %c0_i32 = arith.constant 0 : i32
    %c0_i32_0 = arith.constant 0 : i32
    %c0_i32_1 = arith.constant 0 : i32
    return %c0_i32, %c0_i32_0 : i32, i32
  }
  func.func @transform_6(%arg0: i32) -> (i32, i32) {
    %c0_i32 = arith.constant 0 : i32
    %c0_i32_0 = arith.constant 0 : i32
    %c0_i32_1 = arith.constant 0 : i32
    return %c0_i32, %c0_i32_0 : i32, i32
  }
  func.func @transform_7(%arg0: i32) -> (i32, i32) {
    %c0_i32 = arith.constant 0 : i32
    %c0_i32_0 = arith.constant 0 : i32
    %c0_i32_1 = arith.constant 0 : i32
    return %c0_i32, %c0_i32_0 : i32, i32
  }
  func.func @transform_8(%arg0: i32) -> (i32, i32) {
    %c0_i32 = arith.constant 0 : i32
    %c0_i32_0 = arith.constant 0 : i32
    %c0_i32_1 = arith.constant 0 : i32
    return %c0_i32, %c0_i32_0 : i32, i32
  }
  func.func @transform_9(%arg0: i32) -> (i32, i32) {
    %c0_i32 = arith.constant 0 : i32
    %c0_i32_0 = arith.constant 0 : i32
    return %arg0, %c0_i32 : i32, i32
  }
}

</mosaic_0001>

<llo_original>
// kernel: tile.33
$region0: #{tile.33}
  #allocation0 [shape = 's32[1]{0}', space=sflag, size = 0x4, scoped, tag = 'scoped memory for tile.33']
  %s0 = inlined_call_operand.vmem [shape: f32[10], index: 0, kind: input, shape index: {}]
  %s1 = inlined_call_operand.vmem [shape: f32[32,10], index: 1, kind: output, shape index: {}]
  // Predicated region
  $region2: #{tile.33} parent=0 // pred_check
    _
  $region3: #{tile.33} parent=0 // pred_check_branch
    %3 = sbr.rel (0) target = $region5
  $region4: #{tile.33} parent=0 // pred_region
    _
  $region5: #{tile.33} parent=0 // pred_fallthru
    _
  %v4 = vld [vmem:[%s0] ss:$0 sm:$0xff]
  %5 = vst [vmem:[%s1] sm:$0xff] %v4
  %s6 = scalar_lea.vmem %s1, 8
  %7 = vst [vmem:[%s6] sm:$0xff] %v4
  %s8 = scalar_lea.vmem %s1, 16
  %9 = vst [vmem:[%s8] sm:$0xff] %v4
  %s10 = scalar_lea.vmem %s1, 24
  %11 = vst [vmem:[%s10] sm:$0xff] %v4

// kernel: tile.34
$region0: #{tile.34}
  %s0 = inlined_call_operand.vmem [shape: f32[32,10], index: 0, kind: input, shape index: {}]
  %s1 = inlined_call_operand.vmem [shape: f32[1,320], index: 1, kind: output, shape index: {}]
  $region1: #{tile.34} parent=0
    #allocation0 [shape = 'u8[12288]{0}', space=vmem, size = 0x3000, scoped, tag = 'scoped mem for output reshape']
    %v2 = vld [vmem:[%s0] sm:$0x1]
    %vm3 = vcmask 80896
    %4 = vst.msk [vmem:[#allocation0] sm:$0x1] %vm3, %v2
    %s5 = scalar_lea.vmem %s0, 25
    %v6 = vld [vmem:[%s5] sm:$0x1]
    %s7 = scalar_lea.vmem %s0, 25
    %v8 = vld [vmem:[%s7] sm:$0x1]
    %vm9 = vcmask 48128
    %v10 = vsel %vm9, %v8, %v6
    %11 = vrot.lane.b32.xlu0 %v10, 122
    %v12 = vpop.permute.xlu0 %11
    %vm13 = vcmask 31744
    %s14 = scalar_lea.vmem [#allocation0], 16
    %15 = vst.msk [vmem:[%s14] sm:$0x1] %vm13, %v12
    %vm16 = vcmask 1048528
    %s17 = scalar_lea.vmem [#allocation0], 8
    %18 = vst.msk [vmem:[%s17] sm:$0x1] %vm16, %v12
    %s19 = scalar_lea.vmem %s0, 12
    %v20 = vld [vmem:[%s19] sm:$0x1]
    %s21 = scalar_lea.vmem %s0, 12
    %v22 = vld [vmem:[%s21] sm:$0x1]
    %vm23 = vcmask 64512
    %v24 = vsel %vm23, %v22, %v20
    %25 = vrot.lane.b32.xlu0 %v24, 120
    %v26 = vpop.permute.xlu0 %25
    %vm27 = vcmask 15360
    %s28 = scalar_lea.vmem [#allocation0], 8
    %29 = vst.msk [vmem:[%s28] sm:$0x1] %vm27, %v26
    %vm30 = vcmask 1048512
    %31 = vst.msk [vmem:[#allocation0] sm:$0x1] %vm30, %v26
    %s32 = scalar_lea.vmem %s0, 24
    %v33 = vld [vmem:[%s32] sm:$0x1]
    %34 = vrot.lane.b32.xlu0 %v33, 112
    %v35 = vpop.permute.xlu0 %34
    %vm36 = vcmask 999296
    %s37 = scalar_lea.vmem [#allocation0], 8
    %38 = vst.msk [vmem:[%s37] sm:$0x1] %vm36, %v35
    %s39 = scalar_lea.vmem %s0, 11
    %v40 = vld [vmem:[%s39] sm:$0x1]
    %41 = vrot.lane.b32.xlu0 %v40, 110
    %v42 = vpop.permute.xlu0 %41
    %vm43 = vcmask 982896
    %44 = vst.msk [vmem:[#allocation0] sm:$0x1] %vm43, %v42
    %s45 = scalar_lea.vmem %s0, 23
    %v46 = vld [vmem:[%s45] sm:$0x1]
    %47 = vrot.lane.b32.xlu0 %v46, 102
    %v48 = vpop.permute.xlu0 %47
    %vm49 = vcmask 917296
    %s50 = scalar_lea.vmem [#allocation0], 8
    %51 = vst.msk [vmem:[%s50] sm:$0x1] %vm49, %v48
    %s52 = scalar_lea.vmem %s0, 10
    %v53 = vld [vmem:[%s52] sm:$0x1]
    %54 = vrot.lane.b32.xlu0 %v53, 100
    %v55 = vpop.permute.xlu0 %54
    %vm56 = vcmask 900896
    %57 = vst.msk [vmem:[#allocation0] sm:$0x1] %vm56, %v55
    %s58 = scalar_lea.vmem %s0, 22
    %v59 = vld [vmem:[%s58] sm:$0x1]
    %60 = vrot.lane.b32.xlu0 %v59, 92
    %v61 = vpop.permute.xlu0 %60
    %vm62 = vcmask 835296
    %s63 = scalar_lea.vmem [#allocation0], 8
    %64 = vst.msk [vmem:[%s63] sm:$0x1] %vm62, %v61
    %s65 = scalar_lea.vmem %s0, 9
    %v66 = vld [vmem:[%s65] sm:$0x1]
    %67 = vrot.lane.b32.xlu0 %v66, 90
    %v68 = vpop.permute.xlu0 %67
    %vm69 = vcmask 818896
    %70 = vst.msk [vmem:[#allocation0] sm:$0x1] %vm69, %v68
    %s71 = scalar_lea.vmem %s0, 21
    %v72 = vld [vmem:[%s71] sm:$0x1]
    %73 = vrot.lane.b32.xlu0 %v72, 82
    %v74 = vpop.permute.xlu0 %73
    %vm75 = vcmask 753296
    %s76 = scalar_lea.vmem [#allocation0], 8
    %77 = vst.msk [vmem:[%s76] sm:$0x1] %vm75, %v74
    %s78 = scalar_lea.vmem %s0, 8
    %v79 = vld [vmem:[%s78] sm:$0x1]
    %80 = vrot.lane.b32.xlu0 %v79, 80
    %v81 = vpop.permute.xlu0 %80
    %vm82 = vcmask 736896
    %83 = vst.msk [vmem:[#allocation0] sm:$0x1] %vm82, %v81
    %s84 = scalar_lea.vmem %s0, 20
    %v85 = vld [vmem:[%s84] sm:$0x1]
    %86 = vrot.lane.b32.xlu0 %v85, 72
    %v87 = vpop.permute.xlu0 %86
    %vm88 = vcmask 671296
    %s89 = scalar_lea.vmem [#allocation0], 8
    %90 = vst.msk [vmem:[%s89] sm:$0x1] %vm88, %v87
    %s91 = scalar_lea.vmem %s0, 7
    %v92 = vld [vmem:[%s91] sm:$0x1]
    %93 = vrot.lane.b32.xlu0 %v92, 70
    %v94 = vpop.permute.xlu0 %93
    %vm95 = vcmask 654896
    %96 = vst.msk [vmem:[#allocation0] sm:$0x1] %vm95, %v94
    %s97 = scalar_lea.vmem %s0, 19
    %v98 = vld [vmem:[%s97] sm:$0x1]
    %99 = vrot.lane.b32.xlu0 %v98, 62
    %v100 = vpop.permute.xlu0 %99
    %vm101 = vcmask 589296
    %s102 = scalar_lea.vmem [#allocation0], 8
    %103 = vst.msk [vmem:[%s102] sm:$0x1] %vm101, %v100
    %s104 = scalar_lea.vmem %s0, 6
    %v105 = vld [vmem:[%s104] sm:$0x1]
    %106 = vrot.lane.b32.xlu0 %v105, 60
    %v107 = vpop.permute.xlu0 %106
    %vm108 = vcmask 572896
    %109 = vst.msk [vmem:[#allocation0] sm:$0x1] %vm108, %v107
    %s110 = scalar_lea.vmem %s0, 31
    %v111 = vld [vmem:[%s110] sm:$0x1]
    %112 = vrot.lane.b32.xlu0 %v111, 54
    %v113 = vpop.permute.xlu0 %112
    %vm114 = vcmask 523696
    %s115 = scalar_lea.vmem [#allocation0], 16
    %116 = vst.msk [vmem:[%s115] sm:$0x1] %vm114, %v113
    %s117 = scalar_lea.vmem %s0, 18
    %v118 = vld [vmem:[%s117] sm:$0x1]
    %119 = vrot.lane.b32.xlu0 %v118, 52
    %v120 = vpop.permute.xlu0 %119
    %vm121 = vcmask 507296
    %s122 = scalar_lea.vmem [#allocation0], 8
    %123 = vst.msk [vmem:[%s122] sm:$0x1] %vm121, %v120
    %s124 = scalar_lea.vmem %s0, 5
    %v125 = vld [vmem:[%s124] sm:$0x1]
    %126 = vrot.lane.b32.xlu0 %v125, 50
    %v127 = vpop.permute.xlu0 %126
    %vm128 = vcmask 490896
    %129 = vst.msk [vmem:[#allocation0] sm:$0x1] %vm128, %v127
    %s130 = scalar_lea.vmem %s0, 30
    %v131 = vld [vmem:[%s130] sm:$0x1]
    %132 = vrot.lane.b32.xlu0 %v131, 44
    %v133 = vpop.permute.xlu0 %132
    %vm134 = vcmask 441696
    %s135 = scalar_lea.vmem [#allocation0], 16
    %136 = vst.msk [vmem:[%s135] sm:$0x1] %vm134, %v133
    %s137 = scalar_lea.vmem %s0, 17
    %v138 = vld [vmem:[%s137] sm:$0x1]
    %139 = vrot.lane.b32.xlu0 %v138, 42
    %v140 = vpop.permute.xlu0 %139
    %vm141 = vcmask 425296
    %s142 = scalar_lea.vmem [#allocation0], 8
    %143 = vst.msk [vmem:[%s142] sm:$0x1] %vm141, %v140
    %s144 = scalar_lea.vmem %s0, 4
    %v145 = vld [vmem:[%s144] sm:$0x1]
    %146 = vrot.lane.b32.xlu0 %v145, 40
    %v147 = vpop.permute.xlu0 %146
    %vm148 = vcmask 408896
    %149 = vst.msk [vmem:[#allocation0] sm:$0x1] %vm148, %v147
    %s150 = scalar_lea.vmem %s0, 29
    %v151 = vld [vmem:[%s150] sm:$0x1]
    %152 = vrot.lane.b32.xlu0 %v151, 34
    %v153 = vpop.permute.xlu0 %152
    %vm154 = vcmask 359696
    %s155 = scalar_lea.vmem [#allocation0], 16
    %156 = vst.msk [vmem:[%s155] sm:$0x1] %vm154, %v153
    %s157 = scalar_lea.vmem %s0, 16
    %v158 = vld [vmem:[%s157] sm:$0x1]
    %159 = vrot.lane.b32.xlu0 %v158, 32
    %v160 = vpop.permute.xlu0 %159
    %vm161 = vcmask 343296
    %s162 = scalar_lea.vmem [#allocation0], 8
    %163 = vst.msk [vmem:[%s162] sm:$0x1] %vm161, %v160
    %s164 = scalar_lea.vmem %s0, 3
    %v165 = vld [vmem:[%s164] sm:$0x1]
    %166 = vrot.lane.b32.xlu0 %v165, 30
    %v167 = vpop.permute.xlu0 %166
    %vm168 = vcmask 326896
    %169 = vst.msk [vmem:[#allocation0] sm:$0x1] %vm168, %v167
    %s170 = scalar_lea.vmem %s0, 28
    %v171 = vld [vmem:[%s170] sm:$0x1]
    %172 = vrot.lane.b32.xlu0 %v171, 24
    %v173 = vpop.permute.xlu0 %172
    %vm174 = vcmask 277696
    %s175 = scalar_lea.vmem [#allocation0], 16
    %176 = vst.msk [vmem:[%s175] sm:$0x1] %vm174, %v173
    %s177 = scalar_lea.vmem %s0, 15
    %v178 = vld [vmem:[%s177] sm:$0x1]
    %179 = vrot.lane.b32.xlu0 %v178, 22
    %v180 = vpop.permute.xlu0 %179
    %vm181 = vcmask 261296
    %s182 = scalar_lea.vmem [#allocation0], 8
    %183 = vst.msk [vmem:[%s182] sm:$0x1] %vm181, %v180
    %s184 = scalar_lea.vmem %s0, 2
    %v185 = vld [vmem:[%s184] sm:$0x1]
    %186 = vrot.lane.b32.xlu0 %v185, 20
    %v187 = vpop.permute.xlu0 %186
    %vm188 = vcmask 244896
    %189 = vst.msk [vmem:[#allocation0] sm:$0x1] %vm188, %v187
    %s190 = scalar_lea.vmem %s0, 27
    %v191 = vld [vmem:[%s190] sm:$0x1]
    %192 = vrot.lane.b32.xlu0 %v191, 14
    %v193 = vpop.permute.xlu0 %192
    %vm194 = vcmask 195696
    %s195 = scalar_lea.vmem [#allocation0], 16
    %196 = vst.msk [vmem:[%s195] sm:$0x1] %vm194, %v193
    %s197 = scalar_lea.vmem %s0, 14
    %v198 = vld [vmem:[%s197] sm:$0x1]
    %199 = vrot.lane.b32.xlu0 %v198, 12
    %v200 = vpop.permute.xlu0 %199
    %vm201 = vcmask 179296
    %s202 = scalar_lea.vmem [#allocation0], 8
    %203 = vst.msk [vmem:[%s202] sm:$0x1] %vm201, %v200
    %s204 = scalar_lea.vmem %s0, 1
    %v205 = vld [vmem:[%s204] sm:$0x1]
    %206 = vrot.lane.b32.xlu0 %v205, 10
    %v207 = vpop.permute.xlu0 %206
    %vm208 = vcmask 162896
    %209 = vst.msk [vmem:[#allocation0] sm:$0x1] %vm208, %v207
    %s210 = scalar_lea.vmem %s0, 26
    %v211 = vld [vmem:[%s210] sm:$0x1]
    %212 = vrot.lane.b32.xlu0 %v211, 4
    %v213 = vpop.permute.xlu0 %212
    %vm214 = vcmask 113696
    %s215 = scalar_lea.vmem [#allocation0], 16
    %216 = vst.msk [vmem:[%s215] sm:$0x1] %vm214, %v213
    %s217 = scalar_lea.vmem %s0, 13
    %v218 = vld [vmem:[%s217] sm:$0x1]
    %219 = vrot.lane.b32.xlu0 %v218, 2
    %v220 = vpop.permute.xlu0 %219
    %vm221 = vcmask 97296
    %s222 = scalar_lea.vmem [#allocation0], 8
    %223 = vst.msk [vmem:[%s222] sm:$0x1] %vm221, %v220
    %s225 = ssub.s32 2, 1
    %v226 = vld [vmem:[#allocation0] sm:%s225]
    %s228 = ssub.s32 2, 1
    %229 = vst [vmem:[%s1] sm:%s228] %v226
    %s230 = scalar_lea.vmem [#allocation0], 8
    %v231 = vld [vmem:[%s230] sm:%s225]
    %s233 = ssub.s32 2, 1
    %s234 = scalar_lea.vmem %s1, 1
    %235 = vst [vmem:[%s234] sm:%s233] %v231
    %s236 = scalar_lea.vmem [#allocation0], 16
    %v237 = vld [vmem:[%s236] sm:%s225]
    %s239 = ssub.s32 2, 1
    %s240 = scalar_lea.vmem %s1, 2
    %241 = vst [vmem:[%s240] sm:%s239] %v237

// kernel: tile.23
$region0: #{tile.23}
  #allocation0 [shape = 's32[1]{0}', space=sflag, size = 0x4, scoped, tag = 'scoped memory for tile.23']
  %s0 = inlined_call_operand.vmem [shape: f32[6], index: 0, kind: input, shape index: {}]
  %s1 = inlined_call_operand.vmem [shape: f32[32,6], index: 1, kind: output, shape index: {}]
  // Predicated region
  $region2: #{tile.23} parent=0 // pred_check
    _
  $region3: #{tile.23} parent=0 // pred_check_branch
    %3 = sbr.rel (0) target = $region5
  $region4: #{tile.23} parent=0 // pred_region
    _
  $region5: #{tile.23} parent=0 // pred_fallthru
    _
  %v4 = vld [vmem:[%s0] ss:$0 sm:$0xff]
  %5 = vst [vmem:[%s1] sm:$0xff] %v4
  %s6 = scalar_lea.vmem %s1, 8
  %7 = vst [vmem:[%s6] sm:$0xff] %v4
  %s8 = scalar_lea.vmem %s1, 16
  %9 = vst [vmem:[%s8] sm:$0xff] %v4
  %s10 = scalar_lea.vmem %s1, 24
  %11 = vst [vmem:[%s10] sm:$0xff] %v4

// kernel: tile.24
$region0: #{tile.24}
  %s0 = inlined_call_operand.vmem [shape: f32[32,6], index: 0, kind: input, shape index: {}]
  %s1 = inlined_call_operand.vmem [shape: f32[1,192], index: 1, kind: output, shape index: {}]
  $region1: #{tile.24} parent=0
    #allocation0 [shape = 'u8[8192]{0}', space=vmem, size = 0x2000, scoped, tag = 'scoped mem for output reshape']
    %v2 = vld [vmem:[%s0] sm:$0x1]
    %vm3 = vcmask 48128
    %4 = vst.msk [vmem:[#allocation0] sm:$0x1] %vm3, %v2
    %s5 = scalar_lea.vmem %s0, 21
    %v6 = vld [vmem:[%s5] sm:$0x1]
    %s7 = scalar_lea.vmem %s0, 21
    %v8 = vld [vmem:[%s7] sm:$0x1]
    %vm9 = vcmask 15360
    %v10 = vsel %vm9, %v8, %v6
    %11 = vrot.lane.b32.xlu0 %v10, 126
    %v12 = vpop.permute.xlu0 %11
    %vm13 = vcmask 31744
    %s14 = scalar_lea.vmem [#allocation0], 8
    %15 = vst.msk [vmem:[%s14] sm:$0x1] %vm13, %v12
    %vm16 = vcmask 1048560
    %17 = vst.msk [vmem:[#allocation0] sm:$0x1] %vm16, %v12
    %s18 = scalar_lea.vmem %s0, 20
    %v19 = vld [vmem:[%s18] sm:$0x1]
    %20 = vrot.lane.b32.xlu0 %v19, 120
    %v21 = vpop.permute.xlu0 %20
    %vm22 = vcmask 1032128
    %23 = vst.msk [vmem:[#allocation0] sm:$0x1] %vm22, %v21
    %s24 = scalar_lea.vmem %s0, 19
    %v25 = vld [vmem:[%s24] sm:$0x1]
    %26 = vrot.lane.b32.xlu0 %v25, 114
    %v27 = vpop.permute.xlu0 %26
    %vm28 = vcmask 982928
    %29 = vst.msk [vmem:[#allocation0] sm:$0x1] %vm28, %v27
    %s30 = scalar_lea.vmem %s0, 18
    %v31 = vld [vmem:[%s30] sm:$0x1]
    %32 = vrot.lane.b32.xlu0 %v31, 108
    %v33 = vpop.permute.xlu0 %32
    %vm34 = vcmask 933728
    %35 = vst.msk [vmem:[#allocation0] sm:$0x1] %vm34, %v33
    %s36 = scalar_lea.vmem %s0, 17
    %v37 = vld [vmem:[%s36] sm:$0x1]
    %38 = vrot.lane.b32.xlu0 %v37, 102
    %v39 = vpop.permute.xlu0 %38
    %vm40 = vcmask 884528
    %41 = vst.msk [vmem:[#allocation0] sm:$0x1] %vm40, %v39
    %s42 = scalar_lea.vmem %s0, 16
    %v43 = vld [vmem:[%s42] sm:$0x1]
    %44 = vrot.lane.b32.xlu0 %v43, 96
    %v45 = vpop.permute.xlu0 %44
    %vm46 = vcmask 835328
    %47 = vst.msk [vmem:[#allocation0] sm:$0x1] %vm46, %v45
    %s48 = scalar_lea.vmem %s0, 15
    %v49 = vld [vmem:[%s48] sm:$0x1]
    %50 = vrot.lane.b32.xlu0 %v49, 90
    %v51 = vpop.permute.xlu0 %50
    %vm52 = vcmask 786128
    %53 = vst.msk [vmem:[#allocation0] sm:$0x1] %vm52, %v51
    %s54 = scalar_lea.vmem %s0, 14
    %v55 = vld [vmem:[%s54] sm:$0x1]
    %56 = vrot.lane.b32.xlu0 %v55, 84
    %v57 = vpop.permute.xlu0 %56
    %vm58 = vcmask 736928
    %59 = vst.msk [vmem:[#allocation0] sm:$0x1] %vm58, %v57
    %s60 = scalar_lea.vmem %s0, 13
    %v61 = vld [vmem:[%s60] sm:$0x1]
    %62 = vrot.lane.b32.xlu0 %v61, 78
    %v63 = vpop.permute.xlu0 %62
    %vm64 = vcmask 687728
    %65 = vst.msk [vmem:[#allocation0] sm:$0x1] %vm64, %v63
    %s66 = scalar_lea.vmem %s0, 12
    %v67 = vld [vmem:[%s66] sm:$0x1]
    %68 = vrot.lane.b32.xlu0 %v67, 72
    %v69 = vpop.permute.xlu0 %68
    %vm70 = vcmask 638528
    %71 = vst.msk [vmem:[#allocation0] sm:$0x1] %vm70, %v69
    %s72 = scalar_lea.vmem %s0, 11
    %v73 = vld [vmem:[%s72] sm:$0x1]
    %74 = vrot.lane.b32.xlu0 %v73, 66
    %v75 = vpop.permute.xlu0 %74
    %vm76 = vcmask 589328
    %77 = vst.msk [vmem:[#allocation0] sm:$0x1] %vm76, %v75
    %s78 = scalar_lea.vmem %s0, 10
    %v79 = vld [vmem:[%s78] sm:$0x1]
    %80 = vrot.lane.b32.xlu0 %v79, 60
    %v81 = vpop.permute.xlu0 %80
    %vm82 = vcmask 540128
    %83 = vst.msk [vmem:[#allocation0] sm:$0x1] %vm82, %v81
    %s84 = scalar_lea.vmem %s0, 31
    %v85 = vld [vmem:[%s84] sm:$0x1]
    %86 = vrot.lane.b32.xlu0 %v85, 58
    %v87 = vpop.permute.xlu0 %86
    %vm88 = vcmask 523728
    %s89 = scalar_lea.vmem [#allocation0], 8
    %90 = vst.msk [vmem:[%s89] sm:$0x1] %vm88, %v87
    %s91 = scalar_lea.vmem %s0, 9
    %v92 = vld [vmem:[%s91] sm:$0x1]
    %93 = vrot.lane.b32.xlu0 %v92, 54
    %v94 = vpop.permute.xlu0 %93
    %vm95 = vcmask 490928
    %96 = vst.msk [vmem:[#allocation0] sm:$0x1] %vm95, %v94
    %s97 = scalar_lea.vmem %s0, 30
    %v98 = vld [vmem:[%s97] sm:$0x1]
    %99 = vrot.lane.b32.xlu0 %v98, 52
    %v100 = vpop.permute.xlu0 %99
    %vm101 = vcmask 474528
    %s102 = scalar_lea.vmem [#allocation0], 8
    %103 = vst.msk [vmem:[%s102] sm:$0x1] %vm101, %v100
    %s104 = scalar_lea.vmem %s0, 8
    %v105 = vld [vmem:[%s104] sm:$0x1]
    %106 = vrot.lane.b32.xlu0 %v105, 48
    %v107 = vpop.permute.xlu0 %106
    %vm108 = vcmask 441728
    %109 = vst.msk [vmem:[#allocation0] sm:$0x1] %vm108, %v107
    %s110 = scalar_lea.vmem %s0, 29
    %v111 = vld [vmem:[%s110] sm:$0x1]
    %112 = vrot.lane.b32.xlu0 %v111, 46
    %v113 = vpop.permute.xlu0 %112
    %vm114 = vcmask 425328
    %s115 = scalar_lea.vmem [#allocation0], 8
    %116 = vst.msk [vmem:[%s115] sm:$0x1] %vm114, %v113
    %s117 = scalar_lea.vmem %s0, 7
    %v118 = vld [vmem:[%s117] sm:$0x1]
    %119 = vrot.lane.b32.xlu0 %v118, 42
    %v120 = vpop.permute.xlu0 %119
    %vm121 = vcmask 392528
    %122 = vst.msk [vmem:[#allocation0] sm:$0x1] %vm121, %v120
    %s123 = scalar_lea.vmem %s0, 28
    %v124 = vld [vmem:[%s123] sm:$0x1]
    %125 = vrot.lane.b32.xlu0 %v124, 40
    %v126 = vpop.permute.xlu0 %125
    %vm127 = vcmask 376128
    %s128 = scalar_lea.vmem [#allocation0], 8
    %129 = vst.msk [vmem:[%s128] sm:$0x1] %vm127, %v126
    %s130 = scalar_lea.vmem %s0, 6
    %v131 = vld [vmem:[%s130] sm:$0x1]
    %132 = vrot.lane.b32.xlu0 %v131, 36
    %v133 = vpop.permute.xlu0 %132
    %vm134 = vcmask 343328
    %135 = vst.msk [vmem:[#allocation0] sm:$0x1] %vm134, %v133
    %s136 = scalar_lea.vmem %s0, 27
    %v137 = vld [vmem:[%s136] sm:$0x1]
    %138 = vrot.lane.b32.xlu0 %v137, 34
    %v139 = vpop.permute.xlu0 %138
    %vm140 = vcmask 326928
    %s141 = scalar_lea.vmem [#allocation0], 8
    %142 = vst.msk [vmem:[%s141] sm:$0x1] %vm140, %v139
    %s143 = scalar_lea.vmem %s0, 5
    %v144 = vld [vmem:[%s143] sm:$0x1]
    %145 = vrot.lane.b32.xlu0 %v144, 30
    %v146 = vpop.permute.xlu0 %145
    %vm147 = vcmask 294128
    %148 = vst.msk [vmem:[#allocation0] sm:$0x1] %vm147, %v146
    %s149 = scalar_lea.vmem %s0, 26
    %v150 = vld [vmem:[%s149] sm:$0x1]
    %151 = vrot.lane.b32.xlu0 %v150, 28
    %v152 = vpop.permute.xlu0 %151
    %vm153 = vcmask 277728
    %s154 = scalar_lea.vmem [#allocation0], 8
    %155 = vst.msk [vmem:[%s154] sm:$0x1] %vm153, %v152
    %s156 = scalar_lea.vmem %s0, 4
    %v157 = vld [vmem:[%s156] sm:$0x1]
    %158 = vrot.lane.b32.xlu0 %v157, 24
    %v159 = vpop.permute.xlu0 %158
    %vm160 = vcmask 244928
    %161 = vst.msk [vmem:[#allocation0] sm:$0x1] %vm160, %v159
    %s162 = scalar_lea.vmem %s0, 25
    %v163 = vld [vmem:[%s162] sm:$0x1]
    %164 = vrot.lane.b32.xlu0 %v163, 22
    %v165 = vpop.permute.xlu0 %164
    %vm166 = vcmask 228528
    %s167 = scalar_lea.vmem [#allocation0], 8
    %168 = vst.msk [vmem:[%s167] sm:$0x1] %vm166, %v165
    %s169 = scalar_lea.vmem %s0, 3
    %v170 = vld [vmem:[%s169] sm:$0x1]
    %171 = vrot.lane.b32.xlu0 %v170, 18
    %v172 = vpop.permute.xlu0 %171
    %vm173 = vcmask 195728
    %174 = vst.msk [vmem:[#allocation0] sm:$0x1] %vm173, %v172
    %s175 = scalar_lea.vmem %s0, 24
    %v176 = vld [vmem:[%s175] sm:$0x1]
    %177 = vrot.lane.b32.xlu0 %v176, 16
    %v178 = vpop.permute.xlu0 %177
    %vm179 = vcmask 179328
    %s180 = scalar_lea.vmem [#allocation0], 8
    %181 = vst.msk [vmem:[%s180] sm:$0x1] %vm179, %v178
    %s182 = scalar_lea.vmem %s0, 2
    %v183 = vld [vmem:[%s182] sm:$0x1]
    %184 = vrot.lane.b32.xlu0 %v183, 12
    %v185 = vpop.permute.xlu0 %184
    %vm186 = vcmask 146528
    %187 = vst.msk [vmem:[#allocation0] sm:$0x1] %vm186, %v185
    %s188 = scalar_lea.vmem %s0, 23
    %v189 = vld [vmem:[%s188] sm:$0x1]
    %190 = vrot.lane.b32.xlu0 %v189, 10
    %v191 = vpop.permute.xlu0 %190
    %vm192 = vcmask 130128
    %s193 = scalar_lea.vmem [#allocation0], 8
    %194 = vst.msk [vmem:[%s193] sm:$0x1] %vm192, %v191
    %s195 = scalar_lea.vmem %s0, 1
    %v196 = vld [vmem:[%s195] sm:$0x1]
    %197 = vrot.lane.b32.xlu0 %v196, 6
    %v198 = vpop.permute.xlu0 %197
    %vm199 = vcmask 97328
    %200 = vst.msk [vmem:[#allocation0] sm:$0x1] %vm199, %v198
    %s201 = scalar_lea.vmem %s0, 22
    %v202 = vld [vmem:[%s201] sm:$0x1]
    %203 = vrot.lane.b32.xlu0 %v202, 4
    %v204 = vpop.permute.xlu0 %203
    %vm205 = vcmask 80928
    %s206 = scalar_lea.vmem [#allocation0], 8
    %207 = vst.msk [vmem:[%s206] sm:$0x1] %vm205, %v204
    %s209 = ssub.s32 2, 1
    %v210 = vld [vmem:[#allocation0] sm:%s209]
    %s212 = ssub.s32 2, 1
    %213 = vst [vmem:[%s1] sm:%s212] %v210
    %s214 = scalar_lea.vmem [#allocation0], 8
    %v215 = vld [vmem:[%s214] sm:%s209]
    %s217 = ssub.s32 2, 1
    %s218 = scalar_lea.vmem %s1, 1
    %219 = vst [vmem:[%s218] sm:%s217] %v215

// kernel: tile.28
$region0: #{tile.28}
  #allocation0 [shape = 's32[1]{0}', space=sflag, size = 0x4, scoped, tag = 'scoped memory for tile.28']
  %s0 = inlined_call_operand.vmem [shape: f32[8], index: 0, kind: input, shape index: {}]
  %s1 = inlined_call_operand.vmem [shape: f32[32,8], index: 1, kind: output, shape index: {}]
  // Predicated region
  $region2: #{tile.28} parent=0 // pred_check
    _
  $region3: #{tile.28} parent=0 // pred_check_branch
    %3 = sbr.rel (0) target = $region5
  $region4: #{tile.28} parent=0 // pred_region
    _
  $region5: #{tile.28} parent=0 // pred_fallthru
    _
  %v4 = vld [vmem:[%s0] ss:$0 sm:$0xff]
  %5 = vst [vmem:[%s1] sm:$0xff] %v4
  %s6 = scalar_lea.vmem %s1, 8
  %7 = vst [vmem:[%s6] sm:$0xff] %v4
  %s8 = scalar_lea.vmem %s1, 16
  %9 = vst [vmem:[%s8] sm:$0xff] %v4
  %s10 = scalar_lea.vmem %s1, 24
  %11 = vst [vmem:[%s10] sm:$0xff] %v4

// kernel: tile.29
$region0: #{tile.29}
  %s0 = inlined_call_operand.vmem [shape: f32[32,8], index: 0, kind: input, shape index: {}]
  %s1 = inlined_call_operand.vmem [shape: f32[1,256], index: 1, kind: output, shape index: {}]
  $region1: #{tile.29} parent=0
    #allocation0 [shape = 'u8[8192]{0}', space=vmem, size = 0x2000, scoped, tag = 'scoped mem for output reshape']
    %s2 = smov 3
    %v3 = vld [vmem:[%s0] ss:$16 sm:%s2]
    %vm4 = vcmask 64512
    %5 = vst.msk [vmem:[#allocation0] ss:$8 sm:$0x3] %vm4, %v3
    %s6 = scalar_lea.vmem %s0, 15
    %s7 = smov 3
    %v8 = vld [vmem:[%s6] ss:$16 sm:%s7]
    %9 = vrot.lane.b32.xlu0 %v8, 120
    %v10 = vpop.permute.xlu0 %9
    %vm11 = vcmask 1048512
    %12 = vst.msk [vmem:[#allocation0] ss:$8 sm:$0x3] %vm11, %v10
    %s13 = scalar_lea.vmem %s0, 14
    %s14 = smov 3
    %v15 = vld [vmem:[%s13] ss:$16 sm:%s14]
    %16 = vrot.lane.b32.xlu0 %v15, 112
    %v17 = vpop.permute.xlu0 %16
    %vm18 = vcmask 982912
    %19 = vst.msk [vmem:[#allocation0] ss:$8 sm:$0x3] %vm18, %v17
    %s20 = scalar_lea.vmem %s0, 13
    %s21 = smov 3
    %v22 = vld [vmem:[%s20] ss:$16 sm:%s21]
    %23 = vrot.lane.b32.xlu0 %v22, 104
    %v24 = vpop.permute.xlu0 %23
    %vm25 = vcmask 917312
    %26 = vst.msk [vmem:[#allocation0] ss:$8 sm:$0x3] %vm25, %v24
    %s27 = scalar_lea.vmem %s0, 12
    %s28 = smov 3
    %v29 = vld [vmem:[%s27] ss:$16 sm:%s28]
    %30 = vrot.lane.b32.xlu0 %v29, 96
    %v31 = vpop.permute.xlu0 %30
    %vm32 = vcmask 851712
    %33 = vst.msk [vmem:[#allocation0] ss:$8 sm:$0x3] %vm32, %v31
    %s34 = scalar_lea.vmem %s0, 11
    %s35 = smov 3
    %v36 = vld [vmem:[%s34] ss:$16 sm:%s35]
    %37 = vrot.lane.b32.xlu0 %v36, 88
    %v38 = vpop.permute.xlu0 %37
    %vm39 = vcmask 786112
    %40 = vst.msk [vmem:[#allocation0] ss:$8 sm:$0x3] %vm39, %v38
    %s41 = scalar_lea.vmem %s0, 10
    %s42 = smov 3
    %v43 = vld [vmem:[%s41] ss:$16 sm:%s42]
    %44 = vrot.lane.b32.xlu0 %v43, 80
    %v45 = vpop.permute.xlu0 %44
    %vm46 = vcmask 720512
    %47 = vst.msk [vmem:[#allocation0] ss:$8 sm:$0x3] %vm46, %v45
    %s48 = scalar_lea.vmem %s0, 9
    %s49 = smov 3
    %v50 = vld [vmem:[%s48] ss:$16 sm:%s49]
    %51 = vrot.lane.b32.xlu0 %v50, 72
    %v52 = vpop.permute.xlu0 %51
    %vm53 = vcmask 654912
    %54 = vst.msk [vmem:[#allocation0] ss:$8 sm:$0x3] %vm53, %v52
    %s55 = scalar_lea.vmem %s0, 8
    %s56 = smov 3
    %v57 = vld [vmem:[%s55] ss:$16 sm:%s56]
    %58 = vrot.lane.b32.xlu0 %v57, 64
    %v59 = vpop.permute.xlu0 %58
    %vm60 = vcmask 589312
    %61 = vst.msk [vmem:[#allocation0] ss:$8 sm:$0x3] %vm60, %v59
    %s62 = scalar_lea.vmem %s0, 7
    %s63 = smov 3
    %v64 = vld [vmem:[%s62] ss:$16 sm:%s63]
    %65 = vrot.lane.b32.xlu0 %v64, 56
    %v66 = vpop.permute.xlu0 %65
    %vm67 = vcmask 523712
    %68 = vst.msk [vmem:[#allocation0] ss:$8 sm:$0x3] %vm67, %v66
    %s69 = scalar_lea.vmem %s0, 6
    %s70 = smov 3
    %v71 = vld [vmem:[%s69] ss:$16 sm:%s70]
    %72 = vrot.lane.b32.xlu0 %v71, 48
    %v73 = vpop.permute.xlu0 %72
    %vm74 = vcmask 458112
    %75 = vst.msk [vmem:[#allocation0] ss:$8 sm:$0x3] %vm74, %v73
    %s76 = scalar_lea.vmem %s0, 5
    %s77 = smov 3
    %v78 = vld [vmem:[%s76] ss:$16 sm:%s77]
    %79 = vrot.lane.b32.xlu0 %v78, 40
    %v80 = vpop.permute.xlu0 %79
    %vm81 = vcmask 392512
    %82 = vst.msk [vmem:[#allocation0] ss:$8 sm:$0x3] %vm81, %v80
    %s83 = scalar_lea.vmem %s0, 4
    %s84 = smov 3
    %v85 = vld [vmem:[%s83] ss:$16 sm:%s84]
    %86 = vrot.lane.b32.xlu0 %v85, 32
    %v87 = vpop.permute.xlu0 %86
    %vm88 = vcmask 326912
    %89 = vst.msk [vmem:[#allocation0] ss:$8 sm:$0x3] %vm88, %v87
    %s90 = scalar_lea.vmem %s0, 3
    %s91 = smov 3
    %v92 = vld [vmem:[%s90] ss:$16 sm:%s91]
    %93 = vrot.lane.b32.xlu0 %v92, 24
    %v94 = vpop.permute.xlu0 %93
    %vm95 = vcmask 261312
    %96 = vst.msk [vmem:[#allocation0] ss:$8 sm:$0x3] %vm95, %v94
    %s97 = scalar_lea.vmem %s0, 2
    %s98 = smov 3
    %v99 = vld [vmem:[%s97] ss:$16 sm:%s98]
    %100 = vrot.lane.b32.xlu0 %v99, 16
    %v101 = vpop.permute.xlu0 %100
    %vm102 = vcmask 195712
    %103 = vst.msk [vmem:[#allocation0] ss:$8 sm:$0x3] %vm102, %v101
    %s104 = scalar_lea.vmem %s0, 1
    %s105 = smov 3
    %v106 = vld [vmem:[%s104] ss:$16 sm:%s105]
    %107 = vrot.lane.b32.xlu0 %v106, 8
    %v108 = vpop.permute.xlu0 %107
    %vm109 = vcmask 130112
    %110 = vst.msk [vmem:[#allocation0] ss:$8 sm:$0x3] %vm109, %v108
    %s112 = ssub.s32 2, 1
    %v113 = vld [vmem:[#allocation0] sm:%s112]
    %s115 = ssub.s32 2, 1
    %116 = vst [vmem:[%s1] sm:%s115] %v113
    %s117 = scalar_lea.vmem [#allocation0], 8
    %v118 = vld [vmem:[%s117] sm:%s112]
    %s120 = ssub.s32 2, 1
    %s121 = scalar_lea.vmem %s1, 1
    %122 = vst [vmem:[%s121] sm:%s120] %v118

// kernel: tile.38
$region0: #{tile.38}
  #allocation0 [shape = 's32[1]{0}', space=sflag, size = 0x4, scoped, tag = 'scoped memory for tile.38']
  %s0 = inlined_call_operand.vmem [shape: f32[5], index: 0, kind: input, shape index: {}]
  %s1 = inlined_call_operand.vmem [shape: f32[32,5], index: 1, kind: output, shape index: {}]
  // Predicated region
  $region2: #{tile.38} parent=0 // pred_check
    _
  $region3: #{tile.38} parent=0 // pred_check_branch
    %3 = sbr.rel (0) target = $region5
  $region4: #{tile.38} parent=0 // pred_region
    _
  $region5: #{tile.38} parent=0 // pred_fallthru
    _
  %v4 = vld [vmem:[%s0] ss:$0 sm:$0xff]
  %5 = vst [vmem:[%s1] sm:$0xff] %v4
  %s6 = scalar_lea.vmem %s1, 8
  %7 = vst [vmem:[%s6] sm:$0xff] %v4
  %s8 = scalar_lea.vmem %s1, 16
  %9 = vst [vmem:[%s8] sm:$0xff] %v4
  %s10 = scalar_lea.vmem %s1, 24
  %11 = vst [vmem:[%s10] sm:$0xff] %v4

// kernel: tile.39
$region0: #{tile.39}
  %s0 = inlined_call_operand.vmem [shape: f32[32,5], index: 0, kind: input, shape index: {}]
  %s1 = inlined_call_operand.vmem [shape: f32[1,160], index: 1, kind: output, shape index: {}]
  $region1: #{tile.39} parent=0
    #allocation0 [shape = 'u8[8192]{0}', space=vmem, size = 0x2000, scoped, tag = 'scoped mem for output reshape']
    %v2 = vld [vmem:[%s0] sm:$0x1]
    %vm3 = vcmask 39936
    %4 = vst.msk [vmem:[#allocation0] sm:$0x1] %vm3, %v2
    %s5 = scalar_lea.vmem %s0, 25
    %v6 = vld [vmem:[%s5] sm:$0x1]
    %s7 = scalar_lea.vmem %s0, 25
    %v8 = vld [vmem:[%s7] sm:$0x1]
    %vm9 = vcmask 23552
    %v10 = vsel %vm9, %v8, %v6
    %11 = vrot.lane.b32.xlu0 %v10, 125
    %v12 = vpop.permute.xlu0 %11
    %vm13 = vcmask 15360
    %s14 = scalar_lea.vmem [#allocation0], 8
    %15 = vst.msk [vmem:[%s14] sm:$0x1] %vm13, %v12
    %vm16 = vcmask 1048552
    %17 = vst.msk [vmem:[#allocation0] sm:$0x1] %vm16, %v12
    %s18 = scalar_lea.vmem %s0, 24
    %v19 = vld [vmem:[%s18] sm:$0x1]
    %20 = vrot.lane.b32.xlu0 %v19, 120
    %v21 = vpop.permute.xlu0 %20
    %vm22 = vcmask 1023936
    %23 = vst.msk [vmem:[#allocation0] sm:$0x1] %vm22, %v21
    %s24 = scalar_lea.vmem %s0, 23
    %v25 = vld [vmem:[%s24] sm:$0x1]
    %26 = vrot.lane.b32.xlu0 %v25, 115
    %v27 = vpop.permute.xlu0 %26
    %vm28 = vcmask 982936
    %29 = vst.msk [vmem:[#allocation0] sm:$0x1] %vm28, %v27
    %s30 = scalar_lea.vmem %s0, 22
    %v31 = vld [vmem:[%s30] sm:$0x1]
    %32 = vrot.lane.b32.xlu0 %v31, 110
    %v33 = vpop.permute.xlu0 %32
    %vm34 = vcmask 941936
    %35 = vst.msk [vmem:[#allocation0] sm:$0x1] %vm34, %v33
    %s36 = scalar_lea.vmem %s0, 21
    %v37 = vld [vmem:[%s36] sm:$0x1]
    %38 = vrot.lane.b32.xlu0 %v37, 105
    %v39 = vpop.permute.xlu0 %38
    %vm40 = vcmask 900936
    %41 = vst.msk [vmem:[#allocation0] sm:$0x1] %vm40, %v39
    %s42 = scalar_lea.vmem %s0, 20
    %v43 = vld [vmem:[%s42] sm:$0x1]
    %44 = vrot.lane.b32.xlu0 %v43, 100
    %v45 = vpop.permute.xlu0 %44
    %vm46 = vcmask 859936
    %47 = vst.msk [vmem:[#allocation0] sm:$0x1] %vm46, %v45
    %s48 = scalar_lea.vmem %s0, 19
    %v49 = vld [vmem:[%s48] sm:$0x1]
    %50 = vrot.lane.b32.xlu0 %v49, 95
    %v51 = vpop.permute.xlu0 %50
    %vm52 = vcmask 818936
    %53 = vst.msk [vmem:[#allocation0] sm:$0x1] %vm52, %v51
    %s54 = scalar_lea.vmem %s0, 18
    %v55 = vld [vmem:[%s54] sm:$0x1]
    %56 = vrot.lane.b32.xlu0 %v55, 90
    %v57 = vpop.permute.xlu0 %56
    %vm58 = vcmask 777936
    %59 = vst.msk [vmem:[#allocation0] sm:$0x1] %vm58, %v57
    %s60 = scalar_lea.vmem %s0, 17
    %v61 = vld [vmem:[%s60] sm:$0x1]
    %62 = vrot.lane.b32.xlu0 %v61, 85
    %v63 = vpop.permute.xlu0 %62
    %vm64 = vcmask 736936
    %65 = vst.msk [vmem:[#allocation0] sm:$0x1] %vm64, %v63
    %s66 = scalar_lea.vmem %s0, 16
    %v67 = vld [vmem:[%s66] sm:$0x1]
    %68 = vrot.lane.b32.xlu0 %v67, 80
    %v69 = vpop.permute.xlu0 %68
    %vm70 = vcmask 695936
    %71 = vst.msk [vmem:[#allocation0] sm:$0x1] %vm70, %v69
    %s72 = scalar_lea.vmem %s0, 15
    %v73 = vld [vmem:[%s72] sm:$0x1]
    %74 = vrot.lane.b32.xlu0 %v73, 75
    %v75 = vpop.permute.xlu0 %74
    %vm76 = vcmask 654936
    %77 = vst.msk [vmem:[#allocation0] sm:$0x1] %vm76, %v75
    %s78 = scalar_lea.vmem %s0, 14
    %v79 = vld [vmem:[%s78] sm:$0x1]
    %80 = vrot.lane.b32.xlu0 %v79, 70
    %v81 = vpop.permute.xlu0 %80
    %vm82 = vcmask 613936
    %83 = vst.msk [vmem:[#allocation0] sm:$0x1] %vm82, %v81
    %s84 = scalar_lea.vmem %s0, 13
    %v85 = vld [vmem:[%s84] sm:$0x1]
    %86 = vrot.lane.b32.xlu0 %v85, 65
    %v87 = vpop.permute.xlu0 %86
    %vm88 = vcmask 572936
    %89 = vst.msk [vmem:[#allocation0] sm:$0x1] %vm88, %v87
    %s90 = scalar_lea.vmem %s0, 12
    %v91 = vld [vmem:[%s90] sm:$0x1]
    %92 = vrot.lane.b32.xlu0 %v91, 60
    %v93 = vpop.permute.xlu0 %92
    %vm94 = vcmask 531936
    %95 = vst.msk [vmem:[#allocation0] sm:$0x1] %vm94, %v93
    %s96 = scalar_lea.vmem %s0, 11
    %v97 = vld [vmem:[%s96] sm:$0x1]
    %98 = vrot.lane.b32.xlu0 %v97, 55
    %v99 = vpop.permute.xlu0 %98
    %vm100 = vcmask 490936
    %101 = vst.msk [vmem:[#allocation0] sm:$0x1] %vm100, %v99
    %s102 = scalar_lea.vmem %s0, 10
    %v103 = vld [vmem:[%s102] sm:$0x1]
    %104 = vrot.lane.b32.xlu0 %v103, 50
    %v105 = vpop.permute.xlu0 %104
    %vm106 = vcmask 449936
    %107 = vst.msk [vmem:[#allocation0] sm:$0x1] %vm106, %v105
    %s108 = scalar_lea.vmem %s0, 9
    %v109 = vld [vmem:[%s108] sm:$0x1]
    %110 = vrot.lane.b32.xlu0 %v109, 45
    %v111 = vpop.permute.xlu0 %110
    %vm112 = vcmask 408936
    %113 = vst.msk [vmem:[#allocation0] sm:$0x1] %vm112, %v111
    %s114 = scalar_lea.vmem %s0, 8
    %v115 = vld [vmem:[%s114] sm:$0x1]
    %116 = vrot.lane.b32.xlu0 %v115, 40
    %v117 = vpop.permute.xlu0 %116
    %vm118 = vcmask 367936
    %119 = vst.msk [vmem:[#allocation0] sm:$0x1] %vm118, %v117
    %s120 = scalar_lea.vmem %s0, 7
    %v121 = vld [vmem:[%s120] sm:$0x1]
    %122 = vrot.lane.b32.xlu0 %v121, 35
    %v123 = vpop.permute.xlu0 %122
    %vm124 = vcmask 326936
    %125 = vst.msk [vmem:[#allocation0] sm:$0x1] %vm124, %v123
    %s126 = scalar_lea.vmem %s0, 6
    %v127 = vld [vmem:[%s126] sm:$0x1]
    %128 = vrot.lane.b32.xlu0 %v127, 30
    %v129 = vpop.permute.xlu0 %128
    %vm130 = vcmask 285936
    %131 = vst.msk [vmem:[#allocation0] sm:$0x1] %vm130, %v129
    %s132 = scalar_lea.vmem %s0, 31
    %v133 = vld [vmem:[%s132] sm:$0x1]
    %134 = vrot.lane.b32.xlu0 %v133, 27
    %v135 = vpop.permute.xlu0 %134
    %vm136 = vcmask 261336
    %s137 = scalar_lea.vmem [#allocation0], 8
    %138 = vst.msk [vmem:[%s137] sm:$0x1] %vm136, %v135
    %s139 = scalar_lea.vmem %s0, 5
    %v140 = vld [vmem:[%s139] sm:$0x1]
    %141 = vrot.lane.b32.xlu0 %v140, 25
    %v142 = vpop.permute.xlu0 %141
    %vm143 = vcmask 244936
    %144 = vst.msk [vmem:[#allocation0] sm:$0x1] %vm143, %v142
    %s145 = scalar_lea.vmem %s0, 30
    %v146 = vld [vmem:[%s145] sm:$0x1]
    %147 = vrot.lane.b32.xlu0 %v146, 22
    %v148 = vpop.permute.xlu0 %147
    %vm149 = vcmask 220336
    %s150 = scalar_lea.vmem [#allocation0], 8
    %151 = vst.msk [vmem:[%s150] sm:$0x1] %vm149, %v148
    %s152 = scalar_lea.vmem %s0, 4
    %v153 = vld [vmem:[%s152] sm:$0x1]
    %154 = vrot.lane.b32.xlu0 %v153, 20
    %v155 = vpop.permute.xlu0 %154
    %vm156 = vcmask 203936
    %157 = vst.msk [vmem:[#allocation0] sm:$0x1] %vm156, %v155
    %s158 = scalar_lea.vmem %s0, 29
    %v159 = vld [vmem:[%s158] sm:$0x1]
    %160 = vrot.lane.b32.xlu0 %v159, 17
    %v161 = vpop.permute.xlu0 %160
    %vm162 = vcmask 179336
    %s163 = scalar_lea.vmem [#allocation0], 8
    %164 = vst.msk [vmem:[%s163] sm:$0x1] %vm162, %v161
    %s165 = scalar_lea.vmem %s0, 3
    %v166 = vld [vmem:[%s165] sm:$0x1]
    %167 = vrot.lane.b32.xlu0 %v166, 15
    %v168 = vpop.permute.xlu0 %167
    %vm169 = vcmask 162936
    %170 = vst.msk [vmem:[#allocation0] sm:$0x1] %vm169, %v168
    %s171 = scalar_lea.vmem %s0, 28
    %v172 = vld [vmem:[%s171] sm:$0x1]
    %173 = vrot.lane.b32.xlu0 %v172, 12
    %v174 = vpop.permute.xlu0 %173
    %vm175 = vcmask 138336
    %s176 = scalar_lea.vmem [#allocation0], 8
    %177 = vst.msk [vmem:[%s176] sm:$0x1] %vm175, %v174
    %s178 = scalar_lea.vmem %s0, 2
    %v179 = vld [vmem:[%s178] sm:$0x1]
    %180 = vrot.lane.b32.xlu0 %v179, 10
    %v181 = vpop.permute.xlu0 %180
    %vm182 = vcmask 121936
    %183 = vst.msk [vmem:[#allocation0] sm:$0x1] %vm182, %v181
    %s184 = scalar_lea.vmem %s0, 27
    %v185 = vld [vmem:[%s184] sm:$0x1]
    %186 = vrot.lane.b32.xlu0 %v185, 7
    %v187 = vpop.permute.xlu0 %186
    %vm188 = vcmask 97336
    %s189 = scalar_lea.vmem [#allocation0], 8
    %190 = vst.msk [vmem:[%s189] sm:$0x1] %vm188, %v187
    %s191 = scalar_lea.vmem %s0, 1
    %v192 = vld [vmem:[%s191] sm:$0x1]
    %193 = vrot.lane.b32.xlu0 %v192, 5
    %v194 = vpop.permute.xlu0 %193
    %vm195 = vcmask 80936
    %196 = vst.msk [vmem:[#allocation0] sm:$0x1] %vm195, %v194
    %s197 = scalar_lea.vmem %s0, 26
    %v198 = vld [vmem:[%s197] sm:$0x1]
    %199 = vrot.lane.b32.xlu0 %v198, 2
    %v200 = vpop.permute.xlu0 %199
    %vm201 = vcmask 56336
    %s202 = scalar_lea.vmem [#allocation0], 8
    %203 = vst.msk [vmem:[%s202] sm:$0x1] %vm201, %v200
    %s205 = ssub.s32 2, 1
    %v206 = vld [vmem:[#allocation0] sm:%s205]
    %s208 = ssub.s32 2, 1
    %209 = vst [vmem:[%s1] sm:%s208] %v206
    %s210 = scalar_lea.vmem [#allocation0], 8
    %v211 = vld [vmem:[%s210] sm:%s205]
    %s213 = ssub.s32 2, 1
    %s214 = scalar_lea.vmem %s1, 1
    %215 = vst [vmem:[%s214] sm:%s213] %v211

// kernel: network_features_forward.1
$region0: #{network_features_forward.1}
  #allocation0 [shape = 'u32[]', space=smem, size = 0x4, offset = 0x4, fixed_abs, tag = 'smem constant byte address 0x4 - core index']
  #allocation1 [shape = 'u32[72,128]{1,0:T(1,128)}', space=vmem, size = 0x9000, scoped, tag = 'internal scratch']
  %s0 = inlined_call_operand.vmem [shape: f32[8,128], index: 0, kind: input, shape index: {}]
  %s1 = inlined_call_operand.vmem [shape: f32[128,192], index: 1, kind: input, shape index: {}]
  %s2 = inlined_call_operand.vmem [shape: f32[1,192], index: 2, kind: input, shape index: {}]
  %s3 = inlined_call_operand.vmem [shape: f32[192,256], index: 3, kind: input, shape index: {}]
  %s4 = inlined_call_operand.vmem [shape: f32[1,256], index: 4, kind: input, shape index: {}]
  %s5 = inlined_call_operand.vmem [shape: f32[256,320], index: 5, kind: input, shape index: {}]
  %s6 = inlined_call_operand.vmem [shape: f32[1,320], index: 6, kind: input, shape index: {}]
  %s7 = inlined_call_operand.vmem [shape: f32[320,160], index: 7, kind: input, shape index: {}]
  %s8 = inlined_call_operand.vmem [shape: f32[1,160], index: 8, kind: input, shape index: {}]
  %s9 = inlined_call_operand.vmem [shape: f32[8,160], index: 9, kind: output, shape index: {}]
  %s10 = sld [smem:[#allocation0]]
  $region46: #{network_features_forward.1} parent=0
    _
  %s12 = ssub.s32 1, %s10
  %s13 = scalar_select 0, %s12, %s10
  // Predicated region
  $region2: #{network_features_forward.1} parent=0 // pred_check
    _
  $region3: #{network_features_forward.1} parent=0 // pred_check_branch
    %15 = sbr.rel (0) target = $region5
  $region4: #{network_features_forward.1} parent=0 // pred_region
    _
  $region5: #{network_features_forward.1} parent=0 // pred_fallthru
    _
  // Predicated region
  $region6: #{network_features_forward.1} parent=0 // pred_check
    _
  $region7: #{network_features_forward.1} parent=0 // pred_check_branch
    %17 = sbr.rel (0) target = $region9
  $region8: #{network_features_forward.1} parent=0 // pred_region
    _
  $region9: #{network_features_forward.1} parent=0 // pred_fallthru
    _
  // Predicated region
  $region10: #{network_features_forward.1} parent=0 // pred_check
    _
  $region11: #{network_features_forward.1} parent=0 // pred_check_branch
    %19 = sbr.rel (0) target = $region13
  $region12: #{network_features_forward.1} parent=0 // pred_region
    _
  $region13: #{network_features_forward.1} parent=0 // pred_fallthru
    _
  // Predicated region
  $region14: #{network_features_forward.1} parent=0 // pred_check
    _
  $region15: #{network_features_forward.1} parent=0 // pred_check_branch
    %21 = sbr.rel (0) target = $region17
  $region16: #{network_features_forward.1} parent=0 // pred_region
    _
  $region17: #{network_features_forward.1} parent=0 // pred_fallthru
    _
  // Predicated region
  $region18: #{network_features_forward.1} parent=0 // pred_check
    _
  $region19: #{network_features_forward.1} parent=0 // pred_check_branch
    %23 = sbr.rel (0) target = $region21
  $region20: #{network_features_forward.1} parent=0 // pred_region
    _
  $region21: #{network_features_forward.1} parent=0 // pred_fallthru
    _
  // Predicated region
  $region22: #{network_features_forward.1} parent=0 // pred_check
    _
  $region23: #{network_features_forward.1} parent=0 // pred_check_branch
    %25 = sbr.rel (0) target = $region25
  $region24: #{network_features_forward.1} parent=0 // pred_region
    _
  $region25: #{network_features_forward.1} parent=0 // pred_fallthru
    _
  // Predicated region
  $region26: #{network_features_forward.1} parent=0 // pred_check
    _
  $region27: #{network_features_forward.1} parent=0 // pred_check_branch
    %27 = sbr.rel (0) target = $region29
  $region28: #{network_features_forward.1} parent=0 // pred_region
    _
  $region29: #{network_features_forward.1} parent=0 // pred_fallthru
    _
  // Predicated region
  $region30: #{network_features_forward.1} parent=0 // pred_check
    _
  $region31: #{network_features_forward.1} parent=0 // pred_check_branch
    %29 = sbr.rel (0) target = $region33
  $region32: #{network_features_forward.1} parent=0 // pred_region
    _
  $region33: #{network_features_forward.1} parent=0 // pred_fallthru
    _
  // Predicated region
  $region34: #{network_features_forward.1} parent=0 // pred_check
    _
  $region35: #{network_features_forward.1} parent=0 // pred_check_branch
    %31 = sbr.rel (0) target = $region37
  $region36: #{network_features_forward.1} parent=0 // pred_region
    _
  $region37: #{network_features_forward.1} parent=0 // pred_fallthru
    _
  %v32 = vld [vmem:[%s0] sm:$0xff]
  %v33 = vld [vmem:[%s1] sm:$0xff]
  %v34 = vld [vmem:[%s1 + $0x8] sm:$0xff]
  %v35 = vld [vmem:[%s1 + $0x10] sm:$0xff]
  %v36 = vld [vmem:[%s1 + $0x18] sm:$0xff]
  %v37 = vld [vmem:[%s1 + $0x20] sm:$0xff]
  %v38 = vld [vmem:[%s1 + $0x28] sm:$0xff]
  %v39 = vld [vmem:[%s1 + $0x30] sm:$0xff]
  %v40 = vld [vmem:[%s1 + $0x38] sm:$0xff]
  %v41 = vld [vmem:[%s1 + $0x40] sm:$0xff]
  %v42 = vld [vmem:[%s1 + $0x48] sm:$0xff]
  %v43 = vld [vmem:[%s1 + $0x50] sm:$0xff]
  %v44 = vld [vmem:[%s1 + $0x58] sm:$0xff]
  %v45 = vld [vmem:[%s1 + $0x60] sm:$0xff]
  %v46 = vld [vmem:[%s1 + $0x68] sm:$0xff]
  %v47 = vld [vmem:[%s1 + $0x70] sm:$0xff]
  %v48 = vld [vmem:[%s1 + $0x78] sm:$0xff]
  %v49 = vld [vmem:[%s1 + $0x80] sm:$0xff]
  %v50 = vld [vmem:[%s1 + $0x88] sm:$0xff]
  %v51 = vld [vmem:[%s1 + $0x90] sm:$0xff]
  %v52 = vld [vmem:[%s1 + $0x98] sm:$0xff]
  %v53 = vld [vmem:[%s1 + $0xa0] sm:$0xff]
  %v54 = vld [vmem:[%s1 + $0xa8] sm:$0xff]
  %v55 = vld [vmem:[%s1 + $0xb0] sm:$0xff]
  %v56 = vld [vmem:[%s1 + $0xb8] sm:$0xff]
  %v57 = vld [vmem:[%s1 + $0xc0] sm:$0xff]
  %v58 = vld [vmem:[%s1 + $0xc8] sm:$0xff]
  %v59 = vld [vmem:[%s1 + $0xd0] sm:$0xff]
  %v60 = vld [vmem:[%s1 + $0xd8] sm:$0xff]
  %v61 = vld [vmem:[%s1 + $0xe0] sm:$0xff]
  %v62 = vld [vmem:[%s1 + $0xe8] sm:$0xff]
  %v63 = vld [vmem:[%s1 + $0xf0] sm:$0xff]
  %v64 = vld [vmem:[%s1 + $0xf8] sm:$0xff]
  %v65 = vld [vmem:[%s2] sm:$0x3]
  %v67 = vperm.slane %v65, 0
  %v68 = vperm.slane %v65, 1
  %71 = vmatpush.msra.mxu0 %v63
  %72 = vmatpush.msra.mxu0 %v61
  %73 = vmatpush.msra.mxu0 %v59
  %74 = vmatpush.msra.mxu0 %v57
  %75 = vmatpush.msra.mxu0 %v55
  %76 = vmatpush.msra.mxu0 %v53
  %77 = vmatpush.msra.mxu0 %v51
  %78 = vmatpush.msra.mxu0 %v49
  %79 = vmatpush.msra.mxu0 %v47
  %80 = vmatpush.msra.mxu0 %v45
  %81 = vmatpush.msra.mxu0 %v43
  %82 = vmatpush.msra.mxu0 %v41
  %83 = vmatpush.msra.mxu0 %v39
  %84 = vmatpush.msra.mxu0 %v37
  %85 = vmatpush.msra.mxu0 %v35
  %86 = vmatpush.msra.mxu0 %v33
  %87 = vmatmul.f32.gmra.mxu0 %v32
  %v88 = vpop.f32.mrf.mxu0
  %v89 = vadd.f32 %v67, %v88
  %90 = vdwg.mxu0
  %91 = vmatpush.msra.mxu0 %v64
  %92 = vmatpush.msra.mxu0 %v62
  %93 = vmatpush.msra.mxu0 %v60
  %94 = vmatpush.msra.mxu0 %v58
  %95 = vmatpush.msra.mxu0 %v56
  %96 = vmatpush.msra.mxu0 %v54
  %97 = vmatpush.msra.mxu0 %v52
  %98 = vmatpush.msra.mxu0 %v50
  %99 = vmatpush.msra.mxu0 %v48
  %100 = vmatpush.msra.mxu0 %v46
  %101 = vmatpush.msra.mxu0 %v44
  %102 = vmatpush.msra.mxu0 %v42
  %103 = vmatpush.msra.mxu0 %v40
  %104 = vmatpush.msra.mxu0 %v38
  %105 = vmatpush.msra.mxu0 %v36
  %106 = vmatpush.msra.mxu0 %v34
  %107 = vmatmul.f32.gmra.mxu0 %v32
  %v108 = vpop.f32.mrf.mxu0
  %v109 = vadd.f32 %v68, %v108
  %110 = vdwg.mxu0
  %v111 = vmax.f32 %v89, 0.0
  %v112 = vmax.f32 %v109, 0.0
  %v113 = vld [vmem:[%s3] sm:$0xff]
  %v114 = vld [vmem:[%s3 + $0x8] sm:$0xff]
  %v115 = vld [vmem:[%s3 + $0x10] sm:$0xff]
  %v116 = vld [vmem:[%s3 + $0x18] sm:$0xff]
  %v117 = vld [vmem:[%s3 + $0x20] sm:$0xff]
  %v118 = vld [vmem:[%s3 + $0x28] sm:$0xff]
  %v119 = vld [vmem:[%s3 + $0x30] sm:$0xff]
  %v120 = vld [vmem:[%s3 + $0x38] sm:$0xff]
  %v121 = vld [vmem:[%s3 + $0x40] sm:$0xff]
  %v122 = vld [vmem:[%s3 + $0x48] sm:$0xff]
  %v123 = vld [vmem:[%s3 + $0x50] sm:$0xff]
  %v124 = vld [vmem:[%s3 + $0x58] sm:$0xff]
  %v125 = vld [vmem:[%s3 + $0x60] sm:$0xff]
  %v126 = vld [vmem:[%s3 + $0x68] sm:$0xff]
  %v127 = vld [vmem:[%s3 + $0x70] sm:$0xff]
  %v128 = vld [vmem:[%s3 + $0x78] sm:$0xff]
  %v129 = vld [vmem:[%s3 + $0x80] sm:$0xff]
  %v130 = vld [vmem:[%s3 + $0x88] sm:$0xff]
  %v131 = vld [vmem:[%s3 + $0x90] sm:$0xff]
  %v132 = vld [vmem:[%s3 + $0x98] sm:$0xff]
  %v133 = vld [vmem:[%s3 + $0xa0] sm:$0xff]
  %v134 = vld [vmem:[%s3 + $0xa8] sm:$0xff]
  %v135 = vld [vmem:[%s3 + $0xb0] sm:$0xff]
  %v136 = vld [vmem:[%s3 + $0xb8] sm:$0xff]
  %v137 = vld [vmem:[%s3 + $0xc0] sm:$0xff]
  %v138 = vld [vmem:[%s3 + $0xc8] sm:$0xff]
  %v139 = vld [vmem:[%s3 + $0xd0] sm:$0xff]
  %v140 = vld [vmem:[%s3 + $0xd8] sm:$0xff]
  %v141 = vld [vmem:[%s3 + $0xe0] sm:$0xff]
  %v142 = vld [vmem:[%s3 + $0xe8] sm:$0xff]
  %v143 = vld [vmem:[%s3 + $0xf0] sm:$0xff]
  %v144 = vld [vmem:[%s3 + $0xf8] sm:$0xff]
  %v145 = vld [vmem:[%s3 + $0x100] sm:$0xff]
  %v146 = vld [vmem:[%s3 + $0x108] sm:$0xff]
  %v147 = vld [vmem:[%s3 + $0x110] sm:$0xff]
  %v148 = vld [vmem:[%s3 + $0x118] sm:$0xff]
  %v149 = vld [vmem:[%s3 + $0x120] sm:$0xff]
  %v150 = vld [vmem:[%s3 + $0x128] sm:$0xff]
  %v151 = vld [vmem:[%s3 + $0x130] sm:$0xff]
  %v152 = vld [vmem:[%s3 + $0x138] sm:$0xff]
  %v153 = vld [vmem:[%s3 + $0x140] sm:$0xff]
  %v154 = vld [vmem:[%s3 + $0x148] sm:$0xff]
  %v155 = vld [vmem:[%s3 + $0x150] sm:$0xff]
  %v156 = vld [vmem:[%s3 + $0x158] sm:$0xff]
  %v157 = vld [vmem:[%s3 + $0x160] sm:$0xff]
  %v158 = vld [vmem:[%s3 + $0x168] sm:$0xff]
  %v159 = vld [vmem:[%s3 + $0x170] sm:$0xff]
  %v160 = vld [vmem:[%s3 + $0x178] sm:$0xff]
  %v161 = vld [vmem:[%s4] sm:$0x3]
  %v163 = vperm.slane %v161, 0
  %v164 = vperm.slane %v161, 1
  %vm167 = vcmask 523264
  %v169 = vsel %vm167, %v112, 0
  %171 = vmatpush.msra.mxu0 %v143
  %172 = vmatpush.msra.mxu0 %v141
  %173 = vmatpush.msra.mxu0 %v139
  %174 = vmatpush.msra.mxu0 %v137
  %175 = vmatpush.msra.mxu0 %v135
  %176 = vmatpush.msra.mxu0 %v133
  %177 = vmatpush.msra.mxu0 %v131
  %178 = vmatpush.msra.mxu0 %v129
  %179 = vmatpush.msra.mxu0 %v127
  %180 = vmatpush.msra.mxu0 %v125
  %181 = vmatpush.msra.mxu0 %v123
  %182 = vmatpush.msra.mxu0 %v121
  %183 = vmatpush.msra.mxu0 %v119
  %184 = vmatpush.msra.mxu0 %v117
  %185 = vmatpush.msra.mxu0 %v115
  %186 = vmatpush.msra.mxu0 %v113
  %187 = vmatmul.f32.gmra.mxu0 %v111
  %v188 = vpop.f32.mrf.mxu0
  %v189 = vadd.f32 %v163, %v188
  %190 = vdwg.mxu0
  %191 = vmatpush.msra.mxu0 0.0
  %192 = vmatpush.msra.mxu0 0.0
  %193 = vmatpush.msra.mxu0 0.0
  %194 = vmatpush.msra.mxu0 0.0
  %195 = vmatpush.msra.mxu0 0.0
  %196 = vmatpush.msra.mxu0 0.0
  %197 = vmatpush.msra.mxu0 0.0
  %198 = vmatpush.msra.mxu0 0.0
  %199 = vmatpush.msra.mxu0 %v159
  %200 = vmatpush.msra.mxu0 %v157
  %201 = vmatpush.msra.mxu0 %v155
  %202 = vmatpush.msra.mxu0 %v153
  %203 = vmatpush.msra.mxu0 %v151
  %204 = vmatpush.msra.mxu0 %v149
  %205 = vmatpush.msra.mxu0 %v147
  %206 = vmatpush.msra.mxu0 %v145
  %207 = vmatmul.f32.gmra.mxu0 %v169
  %v208 = vpop.f32.mrf.mxu0
  %v209 = vadd.f32 %v189, %v208
  %210 = vdwg.mxu0
  %211 = vmatpush.msra.mxu0 %v144
  %212 = vmatpush.msra.mxu0 %v142
  %213 = vmatpush.msra.mxu0 %v140
  %214 = vmatpush.msra.mxu0 %v138
  %215 = vmatpush.msra.mxu0 %v136
  %216 = vmatpush.msra.mxu0 %v134
  %217 = vmatpush.msra.mxu0 %v132
  %218 = vmatpush.msra.mxu0 %v130
  %219 = vmatpush.msra.mxu0 %v128
  %220 = vmatpush.msra.mxu0 %v126
  %221 = vmatpush.msra.mxu0 %v124
  %222 = vmatpush.msra.mxu0 %v122
  %223 = vmatpush.msra.mxu0 %v120
  %224 = vmatpush.msra.mxu0 %v118
  %225 = vmatpush.msra.mxu0 %v116
  %226 = vmatpush.msra.mxu0 %v114
  %227 = vmatmul.f32.gmra.mxu0 %v111
  %v228 = vpop.f32.mrf.mxu0
  %v229 = vadd.f32 %v164, %v228
  %230 = vdwg.mxu0
  %231 = vmatpush.msra.mxu0 0.0
  %232 = vmatpush.msra.mxu0 0.0
  %233 = vmatpush.msra.mxu0 0.0
  %234 = vmatpush.msra.mxu0 0.0
  %235 = vmatpush.msra.mxu0 0.0
  %236 = vmatpush.msra.mxu0 0.0
  %237 = vmatpush.msra.mxu0 0.0
  %238 = vmatpush.msra.mxu0 0.0
  %239 = vmatpush.msra.mxu0 %v160
  %240 = vmatpush.msra.mxu0 %v158
  %241 = vmatpush.msra.mxu0 %v156
  %242 = vmatpush.msra.mxu0 %v154
  %243 = vmatpush.msra.mxu0 %v152
  %244 = vmatpush.msra.mxu0 %v150
  %245 = vmatpush.msra.mxu0 %v148
  %246 = vmatpush.msra.mxu0 %v146
  %247 = vmatmul.f32.gmra.mxu0 %v169
  %v248 = vpop.f32.mrf.mxu0
  %v249 = vadd.f32 %v229, %v248
  %250 = vdwg.mxu0
  %v251 = vmax.f32 %v209, 0.0
  %v252 = vmax.f32 %v249, 0.0
  %v253 = vld [vmem:[%s5] sm:$0xff]
  %v254 = vld [vmem:[%s5 + $0x8] sm:$0xff]
  %v255 = vld [vmem:[%s5 + $0x10] sm:$0xff]
  %v256 = vld [vmem:[%s5 + $0x18] sm:$0xff]
  %v257 = vld [vmem:[%s5 + $0x20] sm:$0xff]
  %v258 = vld [vmem:[%s5 + $0x28] sm:$0xff]
  %v259 = vld [vmem:[%s5 + $0x30] sm:$0xff]
  %v260 = vld [vmem:[%s5 + $0x38] sm:$0xff]
  %v261 = vld [vmem:[%s5 + $0x40] sm:$0xff]
  %v262 = vld [vmem:[%s5 + $0x48] sm:$0xff]
  %v263 = vld [vmem:[%s5 + $0x50] sm:$0xff]
  %v264 = vld [vmem:[%s5 + $0x58] sm:$0xff]
  %v265 = vld [vmem:[%s5 + $0x60] sm:$0xff]
  %v266 = vld [vmem:[%s5 + $0x68] sm:$0xff]
  %v267 = vld [vmem:[%s5 + $0x70] sm:$0xff]
  %v268 = vld [vmem:[%s5 + $0x78] sm:$0xff]
  %v269 = vld [vmem:[%s5 + $0x80] sm:$0xff]
  %v270 = vld [vmem:[%s5 + $0x88] sm:$0xff]
  %v271 = vld [vmem:[%s5 + $0x90] sm:$0xff]
  %v272 = vld [vmem:[%s5 + $0x98] sm:$0xff]
  %v273 = vld [vmem:[%s5 + $0xa0] sm:$0xff]
  %v274 = vld [vmem:[%s5 + $0xa8] sm:$0xff]
  %v275 = vld [vmem:[%s5 + $0xb0] sm:$0xff]
  %v276 = vld [vmem:[%s5 + $0xb8] sm:$0xff]
  %v277 = vld [vmem:[%s5 + $0xc0] sm:$0xff]
  %v278 = vld [vmem:[%s5 + $0xc8] sm:$0xff]
  %v279 = vld [vmem:[%s5 + $0xd0] sm:$0xff]
  %v280 = vld [vmem:[%s5 + $0xd8] sm:$0xff]
  %v281 = vld [vmem:[%s5 + $0xe0] sm:$0xff]
  %v282 = vld [vmem:[%s5 + $0xe8] sm:$0xff]
  %v283 = vld [vmem:[%s5 + $0xf0] sm:$0xff]
  %v284 = vld [vmem:[%s5 + $0xf8] sm:$0xff]
  %v285 = vld [vmem:[%s5 + $0x100] sm:$0xff]
  %v286 = vld [vmem:[%s5 + $0x108] sm:$0xff]
  %v287 = vld [vmem:[%s5 + $0x110] sm:$0xff]
  %v288 = vld [vmem:[%s5 + $0x118] sm:$0xff]
  %v289 = vld [vmem:[%s5 + $0x120] sm:$0xff]
  %v290 = vld [vmem:[%s5 + $0x128] sm:$0xff]
  %v291 = vld [vmem:[%s5 + $0x130] sm:$0xff]
  %v292 = vld [vmem:[%s5 + $0x138] sm:$0xff]
  %v293 = vld [vmem:[%s5 + $0x140] sm:$0xff]
  %v294 = vld [vmem:[%s5 + $0x148] sm:$0xff]
  %v295 = vld [vmem:[%s5 + $0x150] sm:$0xff]
  %v296 = vld [vmem:[%s5 + $0x158] sm:$0xff]
  %v297 = vld [vmem:[%s5 + $0x160] sm:$0xff]
  %v298 = vld [vmem:[%s5 + $0x168] sm:$0xff]
  %v299 = vld [vmem:[%s5 + $0x170] sm:$0xff]
  %v300 = vld [vmem:[%s5 + $0x178] sm:$0xff]
  %v301 = vld [vmem:[%s5 + $0x180] sm:$0xff]
  %v302 = vld [vmem:[%s5 + $0x188] sm:$0xff]
  %v303 = vld [vmem:[%s5 + $0x190] sm:$0xff]
  %v304 = vld [vmem:[%s5 + $0x198] sm:$0xff]
  %v305 = vld [vmem:[%s5 + $0x1a0] sm:$0xff]
  %v306 = vld [vmem:[%s5 + $0x1a8] sm:$0xff]
  %v307 = vld [vmem:[%s5 + $0x1b0] sm:$0xff]
  %v308 = vld [vmem:[%s5 + $0x1b8] sm:$0xff]
  %v309 = vld [vmem:[%s5 + $0x1c0] sm:$0xff]
  %v310 = vld [vmem:[%s5 + $0x1c8] sm:$0xff]
  %v311 = vld [vmem:[%s5 + $0x1d0] sm:$0xff]
  %v312 = vld [vmem:[%s5 + $0x1d8] sm:$0xff]
  %v313 = vld [vmem:[%s5 + $0x1e0] sm:$0xff]
  %v314 = vld [vmem:[%s5 + $0x1e8] sm:$0xff]
  %v315 = vld [vmem:[%s5 + $0x1f0] sm:$0xff]
  %v316 = vld [vmem:[%s5 + $0x1f8] sm:$0xff]
  %v317 = vld [vmem:[%s5 + $0x200] sm:$0xff]
  %v318 = vld [vmem:[%s5 + $0x208] sm:$0xff]
  %v319 = vld [vmem:[%s5 + $0x210] sm:$0xff]
  %v320 = vld [vmem:[%s5 + $0x218] sm:$0xff]
  %v321 = vld [vmem:[%s5 + $0x220] sm:$0xff]
  %v322 = vld [vmem:[%s5 + $0x228] sm:$0xff]
  %v323 = vld [vmem:[%s5 + $0x230] sm:$0xff]
  %v324 = vld [vmem:[%s5 + $0x238] sm:$0xff]
  %v325 = vld [vmem:[%s5 + $0x240] sm:$0xff]
  %v326 = vld [vmem:[%s5 + $0x248] sm:$0xff]
  %v327 = vld [vmem:[%s5 + $0x250] sm:$0xff]
  %v328 = vld [vmem:[%s5 + $0x258] sm:$0xff]
  %v329 = vld [vmem:[%s5 + $0x260] sm:$0xff]
  %v330 = vld [vmem:[%s5 + $0x268] sm:$0xff]
  %v331 = vld [vmem:[%s5 + $0x270] sm:$0xff]
  %v332 = vld [vmem:[%s5 + $0x278] sm:$0xff]
  %v333 = vld [vmem:[%s5 + $0x280] sm:$0xff]
  %v334 = vld [vmem:[%s5 + $0x288] sm:$0xff]
  %v335 = vld [vmem:[%s5 + $0x290] sm:$0xff]
  %v336 = vld [vmem:[%s5 + $0x298] sm:$0xff]
  %v337 = vld [vmem:[%s5 + $0x2a0] sm:$0xff]
  %v338 = vld [vmem:[%s5 + $0x2a8] sm:$0xff]
  %v339 = vld [vmem:[%s5 + $0x2b0] sm:$0xff]
  %v340 = vld [vmem:[%s5 + $0x2b8] sm:$0xff]
  %v341 = vld [vmem:[%s5 + $0x2c0] sm:$0xff]
  %v342 = vld [vmem:[%s5 + $0x2c8] sm:$0xff]
  %v343 = vld [vmem:[%s5 + $0x2d0] sm:$0xff]
  %v344 = vld [vmem:[%s5 + $0x2d8] sm:$0xff]
  %v345 = vld [vmem:[%s5 + $0x2e0] sm:$0xff]
  %v346 = vld [vmem:[%s5 + $0x2e8] sm:$0xff]
  %v347 = vld [vmem:[%s5 + $0x2f0] sm:$0xff]
  %v348 = vld [vmem:[%s5 + $0x2f8] sm:$0xff]
  %v349 = vld [vmem:[%s6] sm:$0x7]
  %v351 = vperm.slane %v349, 0
  %v352 = vperm.slane %v349, 1
  %v353 = vperm.slane %v349, 2
  %357 = vmatpush.msra.mxu0 %v298
  %358 = vmatpush.msra.mxu0 %v295
  %359 = vmatpush.msra.mxu0 %v292
  %360 = vmatpush.msra.mxu0 %v289
  %361 = vmatpush.msra.mxu0 %v286
  %362 = vmatpush.msra.mxu0 %v283
  %363 = vmatpush.msra.mxu0 %v280
  %364 = vmatpush.msra.mxu0 %v277
  %365 = vmatpush.msra.mxu0 %v274
  %366 = vmatpush.msra.mxu0 %v271
  %367 = vmatpush.msra.mxu0 %v268
  %368 = vmatpush.msra.mxu0 %v265
  %369 = vmatpush.msra.mxu0 %v262
  %370 = vmatpush.msra.mxu0 %v259
  %371 = vmatpush.msra.mxu0 %v256
  %372 = vmatpush.msra.mxu0 %v253
  %373 = vmatmul.f32.gmra.mxu0 %v251
  %v374 = vpop.f32.mrf.mxu0
  %v375 = vadd.f32 %v351, %v374
  %376 = vdwg.mxu0
  %377 = vmatpush.msra.mxu0 %v346
  %378 = vmatpush.msra.mxu0 %v343
  %379 = vmatpush.msra.mxu0 %v340
  %380 = vmatpush.msra.mxu0 %v337
  %381 = vmatpush.msra.mxu0 %v334
  %382 = vmatpush.msra.mxu0 %v331
  %383 = vmatpush.msra.mxu0 %v328
  %384 = vmatpush.msra.mxu0 %v325
  %385 = vmatpush.msra.mxu0 %v322
  %386 = vmatpush.msra.mxu0 %v319
  %387 = vmatpush.msra.mxu0 %v316
  %388 = vmatpush.msra.mxu0 %v313
  %389 = vmatpush.msra.mxu0 %v310
  %390 = vmatpush.msra.mxu0 %v307
  %391 = vmatpush.msra.mxu0 %v304
  %392 = vmatpush.msra.mxu0 %v301
  %393 = vmatmul.f32.gmra.mxu0 %v252
  %v394 = vpop.f32.mrf.mxu0
  %v395 = vadd.f32 %v375, %v394
  %396 = vdwg.mxu0
  %397 = vmatpush.msra.mxu0 %v299
  %398 = vmatpush.msra.mxu0 %v296
  %399 = vmatpush.msra.mxu0 %v293
  %400 = vmatpush.msra.mxu0 %v290
  %401 = vmatpush.msra.mxu0 %v287
  %402 = vmatpush.msra.mxu0 %v284
  %403 = vmatpush.msra.mxu0 %v281
  %404 = vmatpush.msra.mxu0 %v278
  %405 = vmatpush.msra.mxu0 %v275
  %406 = vmatpush.msra.mxu0 %v272
  %407 = vmatpush.msra.mxu0 %v269
  %408 = vmatpush.msra.mxu0 %v266
  %409 = vmatpush.msra.mxu0 %v263
  %410 = vmatpush.msra.mxu0 %v260
  %411 = vmatpush.msra.mxu0 %v257
  %412 = vmatpush.msra.mxu0 %v254
  %413 = vmatmul.f32.gmra.mxu0 %v251
  %v414 = vpop.f32.mrf.mxu0
  %v415 = vadd.f32 %v352, %v414
  %416 = vdwg.mxu0
  %417 = vmatpush.msra.mxu0 %v347
  %418 = vmatpush.msra.mxu0 %v344
  %419 = vmatpush.msra.mxu0 %v341
  %420 = vmatpush.msra.mxu0 %v338
  %421 = vmatpush.msra.mxu0 %v335
  %422 = vmatpush.msra.mxu0 %v332
  %423 = vmatpush.msra.mxu0 %v329
  %424 = vmatpush.msra.mxu0 %v326
  %425 = vmatpush.msra.mxu0 %v323
  %426 = vmatpush.msra.mxu0 %v320
  %427 = vmatpush.msra.mxu0 %v317
  %428 = vmatpush.msra.mxu0 %v314
  %429 = vmatpush.msra.mxu0 %v311
  %430 = vmatpush.msra.mxu0 %v308
  %431 = vmatpush.msra.mxu0 %v305
  %432 = vmatpush.msra.mxu0 %v302
  %433 = vmatmul.f32.gmra.mxu0 %v252
  %v434 = vpop.f32.mrf.mxu0
  %v435 = vadd.f32 %v415, %v434
  %436 = vdwg.mxu0
  %437 = vmatpush.msra.mxu0 %v300
  %438 = vmatpush.msra.mxu0 %v297
  %439 = vmatpush.msra.mxu0 %v294
  %440 = vmatpush.msra.mxu0 %v291
  %441 = vmatpush.msra.mxu0 %v288
  %442 = vmatpush.msra.mxu0 %v285
  %443 = vmatpush.msra.mxu0 %v282
  %444 = vmatpush.msra.mxu0 %v279
  %445 = vmatpush.msra.mxu0 %v276
  %446 = vmatpush.msra.mxu0 %v273
  %447 = vmatpush.msra.mxu0 %v270
  %448 = vmatpush.msra.mxu0 %v267
  %449 = vmatpush.msra.mxu0 %v264
  %450 = vmatpush.msra.mxu0 %v261
  %451 = vmatpush.msra.mxu0 %v258
  %452 = vmatpush.msra.mxu0 %v255
  %453 = vmatmul.f32.gmra.mxu0 %v251
  %v454 = vpop.f32.mrf.mxu0
  %v455 = vadd.f32 %v353, %v454
  %456 = vdwg.mxu0
  %457 = vmatpush.msra.mxu0 %v348
  %458 = vmatpush.msra.mxu0 %v345
  %459 = vmatpush.msra.mxu0 %v342
  %460 = vmatpush.msra.mxu0 %v339
  %461 = vmatpush.msra.mxu0 %v336
  %462 = vmatpush.msra.mxu0 %v333
  %463 = vmatpush.msra.mxu0 %v330
  %464 = vmatpush.msra.mxu0 %v327
  %465 = vmatpush.msra.mxu0 %v324
  %466 = vmatpush.msra.mxu0 %v321
  %467 = vmatpush.msra.mxu0 %v318
  %468 = vmatpush.msra.mxu0 %v315
  %469 = vmatpush.msra.mxu0 %v312
  %470 = vmatpush.msra.mxu0 %v309
  %471 = vmatpush.msra.mxu0 %v306
  %472 = vmatpush.msra.mxu0 %v303
  %473 = vmatmul.f32.gmra.mxu0 %v252
  %v474 = vpop.f32.mrf.mxu0
  %v475 = vadd.f32 %v455, %v474
  %476 = vdwg.mxu0
  %v477 = vmax.f32 %v395, 0.0
  %v478 = vmax.f32 %v435, 0.0
  %v479 = vmax.f32 %v475, 0.0
  %v480 = vld [vmem:[%s7] sm:$0xff]
  %v481 = vld [vmem:[%s7 + $0x8] sm:$0xff]
  %v482 = vld [vmem:[%s7 + $0x10] sm:$0xff]
  %v483 = vld [vmem:[%s7 + $0x18] sm:$0xff]
  %v484 = vld [vmem:[%s7 + $0x20] sm:$0xff]
  %v485 = vld [vmem:[%s7 + $0x28] sm:$0xff]
  %v486 = vld [vmem:[%s7 + $0x30] sm:$0xff]
  %v487 = vld [vmem:[%s7 + $0x38] sm:$0xff]
  %v488 = vld [vmem:[%s7 + $0x40] sm:$0xff]
  %v489 = vld [vmem:[%s7 + $0x48] sm:$0xff]
  %v490 = vld [vmem:[%s7 + $0x50] sm:$0xff]
  %v491 = vld [vmem:[%s7 + $0x58] sm:$0xff]
  %v492 = vld [vmem:[%s7 + $0x60] sm:$0xff]
  %v493 = vld [vmem:[%s7 + $0x68] sm:$0xff]
  %v494 = vld [vmem:[%s7 + $0x70] sm:$0xff]
  %v495 = vld [vmem:[%s7 + $0x78] sm:$0xff]
  %v496 = vld [vmem:[%s7 + $0x80] sm:$0xff]
  %v497 = vld [vmem:[%s7 + $0x88] sm:$0xff]
  %v498 = vld [vmem:[%s7 + $0x90] sm:$0xff]
  %v499 = vld [vmem:[%s7 + $0x98] sm:$0xff]
  %v500 = vld [vmem:[%s7 + $0xa0] sm:$0xff]
  %v501 = vld [vmem:[%s7 + $0xa8] sm:$0xff]
  %v502 = vld [vmem:[%s7 + $0xb0] sm:$0xff]
  %v503 = vld [vmem:[%s7 + $0xb8] sm:$0xff]
  %v504 = vld [vmem:[%s7 + $0xc0] sm:$0xff]
  %v505 = vld [vmem:[%s7 + $0xc8] sm:$0xff]
  %v506 = vld [vmem:[%s7 + $0xd0] sm:$0xff]
  %v507 = vld [vmem:[%s7 + $0xd8] sm:$0xff]
  %v508 = vld [vmem:[%s7 + $0xe0] sm:$0xff]
  %v509 = vld [vmem:[%s7 + $0xe8] sm:$0xff]
  %v510 = vld [vmem:[%s7 + $0xf0] sm:$0xff]
  %v511 = vld [vmem:[%s7 + $0xf8] sm:$0xff]
  %v512 = vld [vmem:[%s7 + $0x100] sm:$0xff]
  %v513 = vld [vmem:[%s7 + $0x108] sm:$0xff]
  %v514 = vld [vmem:[%s7 + $0x110] sm:$0xff]
  %v515 = vld [vmem:[%s7 + $0x118] sm:$0xff]
  %v516 = vld [vmem:[%s7 + $0x120] sm:$0xff]
  %v517 = vld [vmem:[%s7 + $0x128] sm:$0xff]
  %v518 = vld [vmem:[%s7 + $0x130] sm:$0xff]
  %v519 = vld [vmem:[%s7 + $0x138] sm:$0xff]
  %v520 = vld [vmem:[%s7 + $0x140] sm:$0xff]
  %v521 = vld [vmem:[%s7 + $0x148] sm:$0xff]
  %v522 = vld [vmem:[%s7 + $0x150] sm:$0xff]
  %v523 = vld [vmem:[%s7 + $0x158] sm:$0xff]
  %v524 = vld [vmem:[%s7 + $0x160] sm:$0xff]
  %v525 = vld [vmem:[%s7 + $0x168] sm:$0xff]
  %v526 = vld [vmem:[%s7 + $0x170] sm:$0xff]
  %v527 = vld [vmem:[%s7 + $0x178] sm:$0xff]
  %v528 = vld [vmem:[%s7 + $0x180] sm:$0xff]
  %v529 = vld [vmem:[%s7 + $0x188] sm:$0xff]
  %v530 = vld [vmem:[%s7 + $0x190] sm:$0xff]
  %v531 = vld [vmem:[%s7 + $0x198] sm:$0xff]
  %v532 = vld [vmem:[%s7 + $0x1a0] sm:$0xff]
  %v533 = vld [vmem:[%s7 + $0x1a8] sm:$0xff]
  %v534 = vld [vmem:[%s7 + $0x1b0] sm:$0xff]
  %v535 = vld [vmem:[%s7 + $0x1b8] sm:$0xff]
  %v536 = vld [vmem:[%s7 + $0x1c0] sm:$0xff]
  %v537 = vld [vmem:[%s7 + $0x1c8] sm:$0xff]
  %v538 = vld [vmem:[%s7 + $0x1d0] sm:$0xff]
  %v539 = vld [vmem:[%s7 + $0x1d8] sm:$0xff]
  %v540 = vld [vmem:[%s7 + $0x1e0] sm:$0xff]
  %v541 = vld [vmem:[%s7 + $0x1e8] sm:$0xff]
  %v542 = vld [vmem:[%s7 + $0x1f0] sm:$0xff]
  %v543 = vld [vmem:[%s7 + $0x1f8] sm:$0xff]
  %v544 = vld [vmem:[%s7 + $0x200] sm:$0xff]
  %v545 = vld [vmem:[%s7 + $0x208] sm:$0xff]
  %v546 = vld [vmem:[%s7 + $0x210] sm:$0xff]
  %v547 = vld [vmem:[%s7 + $0x218] sm:$0xff]
  %v548 = vld [vmem:[%s7 + $0x220] sm:$0xff]
  %v549 = vld [vmem:[%s7 + $0x228] sm:$0xff]
  %v550 = vld [vmem:[%s7 + $0x230] sm:$0xff]
  %v551 = vld [vmem:[%s7 + $0x238] sm:$0xff]
  %v552 = vld [vmem:[%s7 + $0x240] sm:$0xff]
  %v553 = vld [vmem:[%s7 + $0x248] sm:$0xff]
  %v554 = vld [vmem:[%s7 + $0x250] sm:$0xff]
  %v555 = vld [vmem:[%s7 + $0x258] sm:$0xff]
  %v556 = vld [vmem:[%s7 + $0x260] sm:$0xff]
  %v557 = vld [vmem:[%s7 + $0x268] sm:$0xff]
  %v558 = vld [vmem:[%s7 + $0x270] sm:$0xff]
  %v559 = vld [vmem:[%s7 + $0x278] sm:$0xff]
  %v560 = vld [vmem:[%s8] sm:$0x3]
  %v562 = vperm.slane %v560, 0
  %v563 = vperm.slane %v560, 1
  %v567 = vsel %vm167, %v479, 0
  %569 = vmatpush.msra.mxu0 %v510
  %570 = vmatpush.msra.mxu0 %v508
  %571 = vmatpush.msra.mxu0 %v506
  %572 = vmatpush.msra.mxu0 %v504
  %573 = vmatpush.msra.mxu0 %v502
  %574 = vmatpush.msra.mxu0 %v500
  %575 = vmatpush.msra.mxu0 %v498
  %576 = vmatpush.msra.mxu0 %v496
  %577 = vmatpush.msra.mxu0 %v494
  %578 = vmatpush.msra.mxu0 %v492
  %579 = vmatpush.msra.mxu0 %v490
  %580 = vmatpush.msra.mxu0 %v488
  %581 = vmatpush.msra.mxu0 %v486
  %582 = vmatpush.msra.mxu0 %v484
  %583 = vmatpush.msra.mxu0 %v482
  %584 = vmatpush.msra.mxu0 %v480
  %585 = vmatmul.f32.gmra.mxu0 %v477
  %v586 = vpop.f32.mrf.mxu0
  %v587 = vadd.f32 %v562, %v586
  %588 = vdwg.mxu0
  %589 = vmatpush.msra.mxu0 %v542
  %590 = vmatpush.msra.mxu0 %v540
  %591 = vmatpush.msra.mxu0 %v538
  %592 = vmatpush.msra.mxu0 %v536
  %593 = vmatpush.msra.mxu0 %v534
  %594 = vmatpush.msra.mxu0 %v532
  %595 = vmatpush.msra.mxu0 %v530
  %596 = vmatpush.msra.mxu0 %v528
  %597 = vmatpush.msra.mxu0 %v526
  %598 = vmatpush.msra.mxu0 %v524
  %599 = vmatpush.msra.mxu0 %v522
  %600 = vmatpush.msra.mxu0 %v520
  %601 = vmatpush.msra.mxu0 %v518
  %602 = vmatpush.msra.mxu0 %v516
  %603 = vmatpush.msra.mxu0 %v514
  %604 = vmatpush.msra.mxu0 %v512
  %605 = vmatmul.f32.gmra.mxu0 %v478
  %v606 = vpop.f32.mrf.mxu0
  %v607 = vadd.f32 %v587, %v606
  %608 = vdwg.mxu0
  %609 = vmatpush.msra.mxu0 0.0
  %610 = vmatpush.msra.mxu0 0.0
  %611 = vmatpush.msra.mxu0 0.0
  %612 = vmatpush.msra.mxu0 0.0
  %613 = vmatpush.msra.mxu0 0.0
  %614 = vmatpush.msra.mxu0 0.0
  %615 = vmatpush.msra.mxu0 0.0
  %616 = vmatpush.msra.mxu0 0.0
  %617 = vmatpush.msra.mxu0 %v558
  %618 = vmatpush.msra.mxu0 %v556
  %619 = vmatpush.msra.mxu0 %v554
  %620 = vmatpush.msra.mxu0 %v552
  %621 = vmatpush.msra.mxu0 %v550
  %622 = vmatpush.msra.mxu0 %v548
  %623 = vmatpush.msra.mxu0 %v546
  %624 = vmatpush.msra.mxu0 %v544
  %625 = vmatmul.f32.gmra.mxu0 %v567
  %v626 = vpop.f32.mrf.mxu0
  %v627 = vadd.f32 %v607, %v626
  %628 = vdwg.mxu0
  %629 = vmatpush.msra.mxu0 %v511
  %630 = vmatpush.msra.mxu0 %v509
  %631 = vmatpush.msra.mxu0 %v507
  %632 = vmatpush.msra.mxu0 %v505
  %633 = vmatpush.msra.mxu0 %v503
  %634 = vmatpush.msra.mxu0 %v501
  %635 = vmatpush.msra.mxu0 %v499
  %636 = vmatpush.msra.mxu0 %v497
  %637 = vmatpush.msra.mxu0 %v495
  %638 = vmatpush.msra.mxu0 %v493
  %639 = vmatpush.msra.mxu0 %v491
  %640 = vmatpush.msra.mxu0 %v489
  %641 = vmatpush.msra.mxu0 %v487
  %642 = vmatpush.msra.mxu0 %v485
  %643 = vmatpush.msra.mxu0 %v483
  %644 = vmatpush.msra.mxu0 %v481
  %645 = vmatmul.f32.gmra.mxu0 %v477
  %v646 = vpop.f32.mrf.mxu0
  %v647 = vadd.f32 %v563, %v646
  %648 = vdwg.mxu0
  %649 = vmatpush.msra.mxu0 %v543
  %650 = vmatpush.msra.mxu0 %v541
  %651 = vmatpush.msra.mxu0 %v539
  %652 = vmatpush.msra.mxu0 %v537
  %653 = vmatpush.msra.mxu0 %v535
  %654 = vmatpush.msra.mxu0 %v533
  %655 = vmatpush.msra.mxu0 %v531
  %656 = vmatpush.msra.mxu0 %v529
  %657 = vmatpush.msra.mxu0 %v527
  %658 = vmatpush.msra.mxu0 %v525
  %659 = vmatpush.msra.mxu0 %v523
  %660 = vmatpush.msra.mxu0 %v521
  %661 = vmatpush.msra.mxu0 %v519
  %662 = vmatpush.msra.mxu0 %v517
  %663 = vmatpush.msra.mxu0 %v515
  %664 = vmatpush.msra.mxu0 %v513
  %665 = vmatmul.f32.gmra.mxu0 %v478
  %v666 = vpop.f32.mrf.mxu0
  %v667 = vadd.f32 %v647, %v666
  %668 = vdwg.mxu0
  %669 = vmatpush.msra.mxu0 0.0
  %670 = vmatpush.msra.mxu0 0.0
  %671 = vmatpush.msra.mxu0 0.0
  %672 = vmatpush.msra.mxu0 0.0
  %673 = vmatpush.msra.mxu0 0.0
  %674 = vmatpush.msra.mxu0 0.0
  %675 = vmatpush.msra.mxu0 0.0
  %676 = vmatpush.msra.mxu0 0.0
  %677 = vmatpush.msra.mxu0 %v559
  %678 = vmatpush.msra.mxu0 %v557
  %679 = vmatpush.msra.mxu0 %v555
  %680 = vmatpush.msra.mxu0 %v553
  %681 = vmatpush.msra.mxu0 %v551
  %682 = vmatpush.msra.mxu0 %v549
  %683 = vmatpush.msra.mxu0 %v547
  %684 = vmatpush.msra.mxu0 %v545
  %685 = vmatmul.f32.gmra.mxu0 %v567
  %v686 = vpop.f32.mrf.mxu0
  %v687 = vadd.f32 %v667, %v686
  %688 = vdwg.mxu0
  %s689 = smul.u32 0, 2
  %s690 = smul.addr %s689, 8
  %s691 = scalar_lea.vmem %s9, %s690
  %692 = vst [vmem:[%s691] sm:$0xff] %v627
  %vm693 = vcmask 261120
  %694 = vst.msk [vmem:[%s691 + $0x8] sm:$0xff] %vm693, %v687
  // Predicated region
  $region38: #{network_features_forward.1} parent=0 // pred_check
    _
  $region39: #{network_features_forward.1} parent=0 // pred_check_branch
    %696 = sbr.rel (0) target = $region41
  $region40: #{network_features_forward.1} parent=0 // pred_region
    _
  $region41: #{network_features_forward.1} parent=0 // pred_fallthru
    _
  // Predicated region
  $region42: #{network_features_forward.1} parent=0 // pred_check
    _
  $region43: #{network_features_forward.1} parent=0 // pred_check_branch
    %698 = sbr.rel (0) target = $region45
  $region44: #{network_features_forward.1} parent=0 // pred_region
    _
  $region45: #{network_features_forward.1} parent=0 // pred_fallthru
    _

</llo_original>
